<compile_context>
chip_gen: v6e
topology: v6e:2x2x1
jax: 0.10.0
libtpu: 0.0.40
codegen_flags: <defaults>
</compile_context>

<pallas_src>
import functools

import jax
import jax.numpy as jnp
from jax.experimental import pallas as pl
from jax.experimental.pallas import tpu as pltpu

# ---------------- configuration (small synthetic sizes) ----------------
INPUT_SIZE = 16
CONTROLLER_SIZE = 32
U_LATENT_SIZE = 8
FORGET_BIAS = 1.0
CLIP_VAL = 5.0
SUBLANE = 8  # f32 sublane tile


def _sigmoid(x):
    # exp + reciprocal both go to the EUP (off the VALU slots).  approx=True is a
    # further (lower-precision) option when ~1e-3 tolerance is acceptable.
    return pl.reciprocal(1.0 + jnp.exp(-x), approx=False)


# ---------------- Pallas kernel: whole sequence in one invocation ----------------
def _controller_fused_kernel(
    x_ref,      # [T*Bp, I]     all timesteps' inputs, rows ordered (t, b)
    h0_ref,     # [Bp, H]       initial hidden state
    wx_ref,     # [I, 3H]       fused [Wx_ru | Wx_c]
    bx_ref,     # [1, 3H]       fused [b_ru (+forget bias) | b_c]
    wh_ru_ref,  # [H, 2H]       h part of fc_xh_ru
    wh_c_ref,   # [H, H]        (r*h) part of fc_xhr_c
    w_u_ref,    # [H, 2U]       fc_u_theta weight
    b_u_ref,    # [1, 2U]       fc_u_theta bias
    out_ref,    # [Bp, T*2U + T*H]  lane-dense slab: [u_stats t=0..T-1 | h t=0..T-1]
    *, T, Bp, H, U,
):
    # Hoist weight loads out of the unrolled time loop.
    wh_ru = wh_ru_ref[...]
    wh_c = wh_c_ref[...]

    # ---- hoisted, batched x-side matmul (no time dependence); bias broadcast once ----
    xw_all = (
        jnp.dot(x_ref[...], wx_ref[...], preferred_element_type=jnp.float32)
        + bx_ref[...]
    )  # [T*Bp, 3H]; forget bias already folded into the u-half of bx

    # ---- recurrence: fully unrolled static loop, h carried in registers ----
    h = h0_ref[...]
    hs = []
    for t in range(T):
        xw = xw_all[t * Bp:(t + 1) * Bp]          # static, sublane-aligned row slice
        ru = xw[:, :2 * H] + jnp.dot(h, wh_ru, preferred_element_type=jnp.float32)
        r = _sigmoid(ru[:, :H])
        u = _sigmoid(ru[:, H:])                   # forget bias folded into bx
        c = jnp.tanh(
            xw[:, 2 * H:]
            + jnp.dot(r * h, wh_c, preferred_element_type=jnp.float32)
        )
        h = jnp.clip(u * h + (1.0 - u) * c, -CLIP_VAL, CLIP_VAL)
        hs.append(h)

    # ---- hoisted, batched fc_u_theta over all timesteps ----
    h_all = jnp.concatenate(hs, axis=0)           # [T*Bp, H]
    u_all = (
        jnp.dot(h_all, w_u_ref[...], preferred_element_type=jnp.float32)
        + b_u_ref[...]
    )                                             # [T*Bp, 2U]

    # ---- single lane-dense output store (T*(2U+H) lanes, multiple of 128 at T=8) ----
    pieces = [u_all[t * Bp:(t + 1) * Bp] for t in range(T)] + hs
    out_ref[...] = jnp.concatenate(pieces, axis=-1)


# ---------------- wrappers ----------------
def lfads_controller_sequence(x_seq, h0, params):
    """Run the controller cell over a whole sequence in ONE pallas_call.

    x_seq : [T, B, INPUT_SIZE]
    h0    : [B, CONTROLLER_SIZE]
    returns (u_mean [T,B,U], u_logvar [T,B,U], controller_states [T,B,H])
    """
    T, B, I = x_seq.shape
    H, U = CONTROLLER_SIZE, U_LATENT_SIZE
    assert I == INPUT_SIZE and h0.shape == (B, H)

    # pad batch to the f32 sublane tile so every vreg / MXU row is fully used
    Bp = max(SUBLANE, ((B + SUBLANE - 1) // SUBLANE) * SUBLANE)
    if Bp != B:
        x_seq = jnp.pad(x_seq, ((0, 0), (0, Bp - B), (0, 0)))
        h0 = jnp.pad(h0, ((0, Bp - B), (0, 0)))

    # collapse (t, b) -> rows once, outside the kernel
    x2d = x_seq.reshape(T * Bp, I)

    # fuse the x-side weights / biases once (outside the kernel)
    wx = jnp.concatenate([params["wx_ru"], params["wx_c"]], axis=1)   # [I, 3H]
    b_ru = params["b_ru"].at[:, H:].add(FORGET_BIAS)                  # fold forget bias
    bx = jnp.concatenate([b_ru, params["b_c"]], axis=1)               # [1, 3H]

    flops = (
        2 * T * Bp * I * 3 * H                       # batched x-side matmul
        + 2 * T * Bp * (H * 2 * H + H * H)           # recurrent matmuls
        + 2 * T * Bp * H * 2 * U                     # batched fc_u_theta
        + 12 * T * Bp * H                            # gates / mix / clip
    )
    trans = 5 * T * Bp * H
    bytes_io = 4 * (
        x2d.size + h0.size + wx.size + bx.size
        + params["wh_ru"].size + params["wh_c"].size
        + params["w_u"].size + params["b_u"].size
        + Bp * T * (2 * U + H)
    )

    kernel = functools.partial(_controller_fused_kernel, T=T, Bp=Bp, H=H, U=U)

    out = pl.pallas_call(
        kernel,
        out_shape=jax.ShapeDtypeStruct((Bp, T * (2 * U + H)), jnp.float32),
        # No grid: the time loop is fully inside the kernel and every operand is a
        # whole-array VMEM-resident block (default BlockSpecs), totalling a few KB.
        cost_estimate=pl.CostEstimate(
            flops=flops, transcendentals=trans, bytes_accessed=bytes_io),
    )(x2d, h0, wx, bx, params["wh_ru"], params["wh_c"], params["w_u"], params["b_u"])

    out = out[:B]                                                   # drop batch padding
    u_slab = out[:, :T * 2 * U].reshape(B, T, 2 * U).transpose(1, 0, 2)   # [T,B,2U]
    h_slab = out[:, T * 2 * U:].reshape(B, T, H).transpose(1, 0, 2)       # [T,B,H]
    return u_slab[..., :U], u_slab[..., U:], h_slab


def lfads_controller_cell(x, h, params):
    """Single-step forward (original module signature), via the fused kernel with T=1."""
    u_mean, u_logvar, states = lfads_controller_sequence(x[None], h, params)
    return u_mean[0], u_logvar[0], states[0]


# ---------------- deterministic parameter init (PyTorch-Linear-style uniform) ----------------
def init_params(key):
    def linear(key, fan_in, fan_out):
        bound = 1.0 / jnp.sqrt(jnp.float32(fan_in))
        kw, kb = jax.random.split(key)
        w = jax.random.uniform(kw, (fan_in, fan_out), jnp.float32, -bound, bound)
        b = jax.random.uniform(kb, (1, fan_out), jnp.float32, -bound, bound)
        return w, b

    keys = jax.random.split(key, 3)
    xh = INPUT_SIZE + CONTROLLER_SIZE

    w_ru, b_ru = linear(keys[0], xh, 2 * CONTROLLER_SIZE)   # fc_xh_ru
    wx_ru, wh_ru = w_ru[:INPUT_SIZE], w_ru[INPUT_SIZE:]

    w_c, b_c = linear(keys[1], xh, CONTROLLER_SIZE)         # fc_xhr_c
    wx_c, wh_c = w_c[:INPUT_SIZE], w_c[INPUT_SIZE:]

    w_u, b_u = linear(keys[2], CONTROLLER_SIZE, 2 * U_LATENT_SIZE)  # fc_u_theta

    return dict(
        wx_ru=wx_ru, wh_ru=wh_ru, b_ru=b_ru,
        wx_c=wx_c, wh_c=wh_c, b_c=b_c,
        w_u=w_u, b_u=b_u,
    )


# ---------------- pure-JAX references for validation ----------------
def cell_reference(x, h, p):
    H, U = CONTROLLER_SIZE, U_LATENT_SIZE
    ru = x @ p["wx_ru"] + h @ p["wh_ru"] + p["b_ru"]
    r = jax.nn.sigmoid(ru[:, :H])
    u = jax.nn.sigmoid(ru[:, H:] + FORGET_BIAS)
    c = jnp.tanh(x @ p["wx_c"] + (r * h) @ p["wh_c"] + p["b_c"])
    h_new = jnp.clip(u * h + (1.0 - u) * c, -CLIP_VAL, CLIP_VAL)
    out = h_new @ p["w_u"] + p["b_u"]
    return out[:, :U], out[:, U:], h_new


def sequence_reference(x_seq, h0, p):
    def step(h, x):
        m, lv, h_new = cell_reference(x, h, p)
        return h_new, (m, lv, h_new)
    _, (m, lv, hs) = jax.lax.scan(step, h0, x_seq)
    return m, lv, hs


if __name__ == "__main__":
    key = jax.random.PRNGKey(0)
    k_x, k_h, k_p = jax.random.split(key, 3)

    T, B = 8, 4
    x_seq = jax.random.normal(k_x, (T, B, INPUT_SIZE), jnp.float32)
    h0 = jax.random.normal(k_h, (B, CONTROLLER_SIZE), jnp.float32)
    params = init_params(k_p)

    # fused time-loop kernel over the whole sequence
    u_mean, u_logvar, states = lfads_controller_sequence(x_seq, h0, params)
    jax.block_until_ready((u_mean, u_logvar, states))

    ref_mean, ref_logvar, ref_states = sequence_reference(x_seq, h0, params)
    assert jnp.allclose(u_mean, ref_mean, atol=1e-4), "u_mean mismatch"
    assert jnp.allclose(u_logvar, ref_logvar, atol=1e-4), "u_logvar mismatch"
    assert jnp.allclose(states, ref_states, atol=1e-4), "controller_state mismatch"

    # single-step forward (original module signature) also goes through the kernel
    m1, lv1, h1 = lfads_controller_cell(x_seq[0], h0, params)
    rm1, rlv1, rh1 = cell_reference(x_seq[0], h0, params)
    assert jnp.allclose(m1, rm1, atol=1e-4), "single-step u_mean mismatch"
    assert jnp.allclose(lv1, rlv1, atol=1e-4), "single-step u_logvar mismatch"
    assert jnp.allclose(h1, rh1, atol=1e-4), "single-step controller_state mismatch"

    print("KERNEL_OK")
</pallas_src>

<mosaic_0001>
module attributes {stable_mosaic.version = 11 : i64} {
  func.func @_controller_fused_kernel(%arg0: memref<64x16xf32, #tpu.memory_space<vmem>>, %arg1: memref<8x32xf32, #tpu.memory_space<vmem>>, %arg2: memref<16x96xf32, #tpu.memory_space<vmem>>, %arg3: memref<1x96xf32, #tpu.memory_space<vmem>>, %arg4: memref<32x64xf32, #tpu.memory_space<vmem>>, %arg5: memref<32x32xf32, #tpu.memory_space<vmem>>, %arg6: memref<32x16xf32, #tpu.memory_space<vmem>>, %arg7: memref<1x16xf32, #tpu.memory_space<vmem>>, %arg8: memref<8x384xf32, #tpu.memory_space<vmem>>) attributes {dimension_semantics = [], scalar_prefetch = 0 : i64, scratch_operands = 0 : i64, tpu.core_type = #tpu.core_type<tc>} {
    %c0 = arith.constant 0 : index
    %c0_0 = arith.constant 0 : index
    %0 = vector.load %arg4[%c0, %c0_0] : memref<32x64xf32, #tpu.memory_space<vmem>>, vector<32x64xf32>
    %c0_1 = arith.constant 0 : index
    %c0_2 = arith.constant 0 : index
    %1 = vector.load %arg5[%c0_1, %c0_2] : memref<32x32xf32, #tpu.memory_space<vmem>>, vector<32x32xf32>
    %c0_3 = arith.constant 0 : index
    %c0_4 = arith.constant 0 : index
    %2 = vector.load %arg0[%c0_3, %c0_4] : memref<64x16xf32, #tpu.memory_space<vmem>>, vector<64x16xf32>
    %c0_5 = arith.constant 0 : index
    %c0_6 = arith.constant 0 : index
    %3 = vector.load %arg2[%c0_5, %c0_6] : memref<16x96xf32, #tpu.memory_space<vmem>>, vector<16x96xf32>
    %cst = arith.constant dense<0.000000e+00> : vector<64x96xf32>
    %4 = tpu.matmul %2, %3, %cst {dimension_numbers = #tpu.dot_dimension_numbers<[1], [0], [0], [1], [0, 0, 1, 1], [], []>} : vector<64x16xf32>, vector<16x96xf32>, vector<64x96xf32> -> vector<64x96xf32>
    %c0_7 = arith.constant 0 : index
    %c0_8 = arith.constant 0 : index
    %5 = vector.load %arg3[%c0_7, %c0_8] : memref<1x96xf32, #tpu.memory_space<vmem>>, vector<1x96xf32>
    %6 = vector.broadcast %5 : vector<1x96xf32> to vector<64x96xf32>
    %7 = arith.addf %4, %6 : vector<64x96xf32>
    %c0_9 = arith.constant 0 : index
    %c0_10 = arith.constant 0 : index
    %8 = vector.load %arg1[%c0_9, %c0_10] : memref<8x32xf32, #tpu.memory_space<vmem>>, vector<8x32xf32>
    %9 = vector.extract_strided_slice %7 {offsets = [0, 0], sizes = [8, 96], strides = [1, 1]} : vector<64x96xf32> to vector<8x96xf32>
    %10 = vector.extract_strided_slice %9 {offsets = [0, 0], sizes = [8, 64], strides = [1, 1]} : vector<8x96xf32> to vector<8x64xf32>
    %cst_11 = arith.constant dense<0.000000e+00> : vector<8x64xf32>
    %11 = tpu.matmul %8, %0, %cst_11 {dimension_numbers = #tpu.dot_dimension_numbers<[1], [0], [0], [1], [0, 0, 1, 1], [], []>} : vector<8x32xf32>, vector<32x64xf32>, vector<8x64xf32> -> vector<8x64xf32>
    %12 = arith.addf %10, %11 : vector<8x64xf32>
    %13 = vector.extract_strided_slice %12 {offsets = [0, 0], sizes = [8, 32], strides = [1, 1]} : vector<8x64xf32> to vector<8x32xf32>
    %cst_12 = arith.constant 0.000000e+00 : f32
    %14 = vector.broadcast %cst_12 : f32 to vector<8x32xf32>
    %15 = arith.subf %14, %13 : vector<8x32xf32>
    %16 = math.exp %15 : vector<8x32xf32>
    %cst_13 = arith.constant 1.000000e+00 : f32
    %17 = vector.broadcast %cst_13 : f32 to vector<8x32xf32>
    %18 = arith.addf %17, %16 : vector<8x32xf32>
    %19 = tpu.reciprocal %18 : vector<8x32xf32> -> vector<8x32xf32>
    %20 = vector.extract_strided_slice %12 {offsets = [0, 32], sizes = [8, 32], strides = [1, 1]} : vector<8x64xf32> to vector<8x32xf32>
    %cst_14 = arith.constant 0.000000e+00 : f32
    %21 = vector.broadcast %cst_14 : f32 to vector<8x32xf32>
    %22 = arith.subf %21, %20 : vector<8x32xf32>
    %23 = math.exp %22 : vector<8x32xf32>
    %cst_15 = arith.constant 1.000000e+00 : f32
    %24 = vector.broadcast %cst_15 : f32 to vector<8x32xf32>
    %25 = arith.addf %24, %23 : vector<8x32xf32>
    %26 = tpu.reciprocal %25 : vector<8x32xf32> -> vector<8x32xf32>
    %27 = vector.extract_strided_slice %9 {offsets = [0, 64], sizes = [8, 32], strides = [1, 1]} : vector<8x96xf32> to vector<8x32xf32>
    %28 = arith.mulf %19, %8 : vector<8x32xf32>
    %cst_16 = arith.constant dense<0.000000e+00> : vector<8x32xf32>
    %29 = tpu.matmul %28, %1, %cst_16 {dimension_numbers = #tpu.dot_dimension_numbers<[1], [0], [0], [1], [0, 0, 1, 1], [], []>} : vector<8x32xf32>, vector<32x32xf32>, vector<8x32xf32> -> vector<8x32xf32>
    %30 = arith.addf %27, %29 : vector<8x32xf32>
    %31 = math.tanh %30 : vector<8x32xf32>
    %32 = arith.mulf %26, %8 : vector<8x32xf32>
    %cst_17 = arith.constant 1.000000e+00 : f32
    %33 = vector.broadcast %cst_17 : f32 to vector<8x32xf32>
    %34 = arith.subf %33, %26 : vector<8x32xf32>
    %35 = arith.mulf %34, %31 : vector<8x32xf32>
    %36 = arith.addf %32, %35 : vector<8x32xf32>
    %cst_18 = arith.constant -5.000000e+00 : f32
    %cst_19 = arith.constant 5.000000e+00 : f32
    %37 = vector.broadcast %cst_18 : f32 to vector<8x32xf32>
    %38 = arith.maximumf %37, %36 : vector<8x32xf32>
    %39 = vector.broadcast %cst_19 : f32 to vector<8x32xf32>
    %40 = arith.minimumf %39, %38 : vector<8x32xf32>
    %41 = vector.extract_strided_slice %7 {offsets = [8, 0], sizes = [8, 96], strides = [1, 1]} : vector<64x96xf32> to vector<8x96xf32>
    %42 = vector.extract_strided_slice %41 {offsets = [0, 0], sizes = [8, 64], strides = [1, 1]} : vector<8x96xf32> to vector<8x64xf32>
    %cst_20 = arith.constant dense<0.000000e+00> : vector<8x64xf32>
    %43 = tpu.matmul %40, %0, %cst_20 {dimension_numbers = #tpu.dot_dimension_numbers<[1], [0], [0], [1], [0, 0, 1, 1], [], []>} : vector<8x32xf32>, vector<32x64xf32>, vector<8x64xf32> -> vector<8x64xf32>
    %44 = arith.addf %42, %43 : vector<8x64xf32>
    %45 = vector.extract_strided_slice %44 {offsets = [0, 0], sizes = [8, 32], strides = [1, 1]} : vector<8x64xf32> to vector<8x32xf32>
    %cst_21 = arith.constant 0.000000e+00 : f32
    %46 = vector.broadcast %cst_21 : f32 to vector<8x32xf32>
    %47 = arith.subf %46, %45 : vector<8x32xf32>
    %48 = math.exp %47 : vector<8x32xf32>
    %cst_22 = arith.constant 1.000000e+00 : f32
    %49 = vector.broadcast %cst_22 : f32 to vector<8x32xf32>
    %50 = arith.addf %49, %48 : vector<8x32xf32>
    %51 = tpu.reciprocal %50 : vector<8x32xf32> -> vector<8x32xf32>
    %52 = vector.extract_strided_slice %44 {offsets = [0, 32], sizes = [8, 32], strides = [1, 1]} : vector<8x64xf32> to vector<8x32xf32>
    %cst_23 = arith.constant 0.000000e+00 : f32
    %53 = vector.broadcast %cst_23 : f32 to vector<8x32xf32>
    %54 = arith.subf %53, %52 : vector<8x32xf32>
    %55 = math.exp %54 : vector<8x32xf32>
    %cst_24 = arith.constant 1.000000e+00 : f32
    %56 = vector.broadcast %cst_24 : f32 to vector<8x32xf32>
    %57 = arith.addf %56, %55 : vector<8x32xf32>
    %58 = tpu.reciprocal %57 : vector<8x32xf32> -> vector<8x32xf32>
    %59 = vector.extract_strided_slice %41 {offsets = [0, 64], sizes = [8, 32], strides = [1, 1]} : vector<8x96xf32> to vector<8x32xf32>
    %60 = arith.mulf %51, %40 : vector<8x32xf32>
    %cst_25 = arith.constant dense<0.000000e+00> : vector<8x32xf32>
    %61 = tpu.matmul %60, %1, %cst_25 {dimension_numbers = #tpu.dot_dimension_numbers<[1], [0], [0], [1], [0, 0, 1, 1], [], []>} : vector<8x32xf32>, vector<32x32xf32>, vector<8x32xf32> -> vector<8x32xf32>
    %62 = arith.addf %59, %61 : vector<8x32xf32>
    %63 = math.tanh %62 : vector<8x32xf32>
    %64 = arith.mulf %58, %40 : vector<8x32xf32>
    %cst_26 = arith.constant 1.000000e+00 : f32
    %65 = vector.broadcast %cst_26 : f32 to vector<8x32xf32>
    %66 = arith.subf %65, %58 : vector<8x32xf32>
    %67 = arith.mulf %66, %63 : vector<8x32xf32>
    %68 = arith.addf %64, %67 : vector<8x32xf32>
    %cst_27 = arith.constant -5.000000e+00 : f32
    %cst_28 = arith.constant 5.000000e+00 : f32
    %69 = vector.broadcast %cst_27 : f32 to vector<8x32xf32>
    %70 = arith.maximumf %69, %68 : vector<8x32xf32>
    %71 = vector.broadcast %cst_28 : f32 to vector<8x32xf32>
    %72 = arith.minimumf %71, %70 : vector<8x32xf32>
    %73 = vector.extract_strided_slice %7 {offsets = [16, 0], sizes = [8, 96], strides = [1, 1]} : vector<64x96xf32> to vector<8x96xf32>
    %74 = vector.extract_strided_slice %73 {offsets = [0, 0], sizes = [8, 64], strides = [1, 1]} : vector<8x96xf32> to vector<8x64xf32>
    %cst_29 = arith.constant dense<0.000000e+00> : vector<8x64xf32>
    %75 = tpu.matmul %72, %0, %cst_29 {dimension_numbers = #tpu.dot_dimension_numbers<[1], [0], [0], [1], [0, 0, 1, 1], [], []>} : vector<8x32xf32>, vector<32x64xf32>, vector<8x64xf32> -> vector<8x64xf32>
    %76 = arith.addf %74, %75 : vector<8x64xf32>
    %77 = vector.extract_strided_slice %76 {offsets = [0, 0], sizes = [8, 32], strides = [1, 1]} : vector<8x64xf32> to vector<8x32xf32>
    %cst_30 = arith.constant 0.000000e+00 : f32
    %78 = vector.broadcast %cst_30 : f32 to vector<8x32xf32>
    %79 = arith.subf %78, %77 : vector<8x32xf32>
    %80 = math.exp %79 : vector<8x32xf32>
    %cst_31 = arith.constant 1.000000e+00 : f32
    %81 = vector.broadcast %cst_31 : f32 to vector<8x32xf32>
    %82 = arith.addf %81, %80 : vector<8x32xf32>
    %83 = tpu.reciprocal %82 : vector<8x32xf32> -> vector<8x32xf32>
    %84 = vector.extract_strided_slice %76 {offsets = [0, 32], sizes = [8, 32], strides = [1, 1]} : vector<8x64xf32> to vector<8x32xf32>
    %cst_32 = arith.constant 0.000000e+00 : f32
    %85 = vector.broadcast %cst_32 : f32 to vector<8x32xf32>
    %86 = arith.subf %85, %84 : vector<8x32xf32>
    %87 = math.exp %86 : vector<8x32xf32>
    %cst_33 = arith.constant 1.000000e+00 : f32
    %88 = vector.broadcast %cst_33 : f32 to vector<8x32xf32>
    %89 = arith.addf %88, %87 : vector<8x32xf32>
    %90 = tpu.reciprocal %89 : vector<8x32xf32> -> vector<8x32xf32>
    %91 = vector.extract_strided_slice %73 {offsets = [0, 64], sizes = [8, 32], strides = [1, 1]} : vector<8x96xf32> to vector<8x32xf32>
    %92 = arith.mulf %83, %72 : vector<8x32xf32>
    %cst_34 = arith.constant dense<0.000000e+00> : vector<8x32xf32>
    %93 = tpu.matmul %92, %1, %cst_34 {dimension_numbers = #tpu.dot_dimension_numbers<[1], [0], [0], [1], [0, 0, 1, 1], [], []>} : vector<8x32xf32>, vector<32x32xf32>, vector<8x32xf32> -> vector<8x32xf32>
    %94 = arith.addf %91, %93 : vector<8x32xf32>
    %95 = math.tanh %94 : vector<8x32xf32>
    %96 = arith.mulf %90, %72 : vector<8x32xf32>
    %cst_35 = arith.constant 1.000000e+00 : f32
    %97 = vector.broadcast %cst_35 : f32 to vector<8x32xf32>
    %98 = arith.subf %97, %90 : vector<8x32xf32>
    %99 = arith.mulf %98, %95 : vector<8x32xf32>
    %100 = arith.addf %96, %99 : vector<8x32xf32>
    %cst_36 = arith.constant -5.000000e+00 : f32
    %cst_37 = arith.constant 5.000000e+00 : f32
    %101 = vector.broadcast %cst_36 : f32 to vector<8x32xf32>
    %102 = arith.maximumf %101, %100 : vector<8x32xf32>
    %103 = vector.broadcast %cst_37 : f32 to vector<8x32xf32>
    %104 = arith.minimumf %103, %102 : vector<8x32xf32>
    %105 = vector.extract_strided_slice %7 {offsets = [24, 0], sizes = [8, 96], strides = [1, 1]} : vector<64x96xf32> to vector<8x96xf32>
    %106 = vector.extract_strided_slice %105 {offsets = [0, 0], sizes = [8, 64], strides = [1, 1]} : vector<8x96xf32> to vector<8x64xf32>
    %cst_38 = arith.constant dense<0.000000e+00> : vector<8x64xf32>
    %107 = tpu.matmul %104, %0, %cst_38 {dimension_numbers = #tpu.dot_dimension_numbers<[1], [0], [0], [1], [0, 0, 1, 1], [], []>} : vector<8x32xf32>, vector<32x64xf32>, vector<8x64xf32> -> vector<8x64xf32>
    %108 = arith.addf %106, %107 : vector<8x64xf32>
    %109 = vector.extract_strided_slice %108 {offsets = [0, 0], sizes = [8, 32], strides = [1, 1]} : vector<8x64xf32> to vector<8x32xf32>
    %cst_39 = arith.constant 0.000000e+00 : f32
    %110 = vector.broadcast %cst_39 : f32 to vector<8x32xf32>
    %111 = arith.subf %110, %109 : vector<8x32xf32>
    %112 = math.exp %111 : vector<8x32xf32>
    %cst_40 = arith.constant 1.000000e+00 : f32
    %113 = vector.broadcast %cst_40 : f32 to vector<8x32xf32>
    %114 = arith.addf %113, %112 : vector<8x32xf32>
    %115 = tpu.reciprocal %114 : vector<8x32xf32> -> vector<8x32xf32>
    %116 = vector.extract_strided_slice %108 {offsets = [0, 32], sizes = [8, 32], strides = [1, 1]} : vector<8x64xf32> to vector<8x32xf32>
    %cst_41 = arith.constant 0.000000e+00 : f32
    %117 = vector.broadcast %cst_41 : f32 to vector<8x32xf32>
    %118 = arith.subf %117, %116 : vector<8x32xf32>
    %119 = math.exp %118 : vector<8x32xf32>
    %cst_42 = arith.constant 1.000000e+00 : f32
    %120 = vector.broadcast %cst_42 : f32 to vector<8x32xf32>
    %121 = arith.addf %120, %119 : vector<8x32xf32>
    %122 = tpu.reciprocal %121 : vector<8x32xf32> -> vector<8x32xf32>
    %123 = vector.extract_strided_slice %105 {offsets = [0, 64], sizes = [8, 32], strides = [1, 1]} : vector<8x96xf32> to vector<8x32xf32>
    %124 = arith.mulf %115, %104 : vector<8x32xf32>
    %cst_43 = arith.constant dense<0.000000e+00> : vector<8x32xf32>
    %125 = tpu.matmul %124, %1, %cst_43 {dimension_numbers = #tpu.dot_dimension_numbers<[1], [0], [0], [1], [0, 0, 1, 1], [], []>} : vector<8x32xf32>, vector<32x32xf32>, vector<8x32xf32> -> vector<8x32xf32>
    %126 = arith.addf %123, %125 : vector<8x32xf32>
    %127 = math.tanh %126 : vector<8x32xf32>
    %128 = arith.mulf %122, %104 : vector<8x32xf32>
    %cst_44 = arith.constant 1.000000e+00 : f32
    %129 = vector.broadcast %cst_44 : f32 to vector<8x32xf32>
    %130 = arith.subf %129, %122 : vector<8x32xf32>
    %131 = arith.mulf %130, %127 : vector<8x32xf32>
    %132 = arith.addf %128, %131 : vector<8x32xf32>
    %cst_45 = arith.constant -5.000000e+00 : f32
    %cst_46 = arith.constant 5.000000e+00 : f32
    %133 = vector.broadcast %cst_45 : f32 to vector<8x32xf32>
    %134 = arith.maximumf %133, %132 : vector<8x32xf32>
    %135 = vector.broadcast %cst_46 : f32 to vector<8x32xf32>
    %136 = arith.minimumf %135, %134 : vector<8x32xf32>
    %137 = vector.extract_strided_slice %7 {offsets = [32, 0], sizes = [8, 96], strides = [1, 1]} : vector<64x96xf32> to vector<8x96xf32>
    %138 = vector.extract_strided_slice %137 {offsets = [0, 0], sizes = [8, 64], strides = [1, 1]} : vector<8x96xf32> to vector<8x64xf32>
    %cst_47 = arith.constant dense<0.000000e+00> : vector<8x64xf32>
    %139 = tpu.matmul %136, %0, %cst_47 {dimension_numbers = #tpu.dot_dimension_numbers<[1], [0], [0], [1], [0, 0, 1, 1], [], []>} : vector<8x32xf32>, vector<32x64xf32>, vector<8x64xf32> -> vector<8x64xf32>
    %140 = arith.addf %138, %139 : vector<8x64xf32>
    %141 = vector.extract_strided_slice %140 {offsets = [0, 0], sizes = [8, 32], strides = [1, 1]} : vector<8x64xf32> to vector<8x32xf32>
    %cst_48 = arith.constant 0.000000e+00 : f32
    %142 = vector.broadcast %cst_48 : f32 to vector<8x32xf32>
    %143 = arith.subf %142, %141 : vector<8x32xf32>
    %144 = math.exp %143 : vector<8x32xf32>
    %cst_49 = arith.constant 1.000000e+00 : f32
    %145 = vector.broadcast %cst_49 : f32 to vector<8x32xf32>
    %146 = arith.addf %145, %144 : vector<8x32xf32>
    %147 = tpu.reciprocal %146 : vector<8x32xf32> -> vector<8x32xf32>
    %148 = vector.extract_strided_slice %140 {offsets = [0, 32], sizes = [8, 32], strides = [1, 1]} : vector<8x64xf32> to vector<8x32xf32>
    %cst_50 = arith.constant 0.000000e+00 : f32
    %149 = vector.broadcast %cst_50 : f32 to vector<8x32xf32>
    %150 = arith.subf %149, %148 : vector<8x32xf32>
    %151 = math.exp %150 : vector<8x32xf32>
    %cst_51 = arith.constant 1.000000e+00 : f32
    %152 = vector.broadcast %cst_51 : f32 to vector<8x32xf32>
    %153 = arith.addf %152, %151 : vector<8x32xf32>
    %154 = tpu.reciprocal %153 : vector<8x32xf32> -> vector<8x32xf32>
    %155 = vector.extract_strided_slice %137 {offsets = [0, 64], sizes = [8, 32], strides = [1, 1]} : vector<8x96xf32> to vector<8x32xf32>
    %156 = arith.mulf %147, %136 : vector<8x32xf32>
    %cst_52 = arith.constant dense<0.000000e+00> : vector<8x32xf32>
    %157 = tpu.matmul %156, %1, %cst_52 {dimension_numbers = #tpu.dot_dimension_numbers<[1], [0], [0], [1], [0, 0, 1, 1], [], []>} : vector<8x32xf32>, vector<32x32xf32>, vector<8x32xf32> -> vector<8x32xf32>
    %158 = arith.addf %155, %157 : vector<8x32xf32>
    %159 = math.tanh %158 : vector<8x32xf32>
    %160 = arith.mulf %154, %136 : vector<8x32xf32>
    %cst_53 = arith.constant 1.000000e+00 : f32
    %161 = vector.broadcast %cst_53 : f32 to vector<8x32xf32>
    %162 = arith.subf %161, %154 : vector<8x32xf32>
    %163 = arith.mulf %162, %159 : vector<8x32xf32>
    %164 = arith.addf %160, %163 : vector<8x32xf32>
    %cst_54 = arith.constant -5.000000e+00 : f32
    %cst_55 = arith.constant 5.000000e+00 : f32
    %165 = vector.broadcast %cst_54 : f32 to vector<8x32xf32>
    %166 = arith.maximumf %165, %164 : vector<8x32xf32>
    %167 = vector.broadcast %cst_55 : f32 to vector<8x32xf32>
    %168 = arith.minimumf %167, %166 : vector<8x32xf32>
    %169 = vector.extract_strided_slice %7 {offsets = [40, 0], sizes = [8, 96], strides = [1, 1]} : vector<64x96xf32> to vector<8x96xf32>
    %170 = vector.extract_strided_slice %169 {offsets = [0, 0], sizes = [8, 64], strides = [1, 1]} : vector<8x96xf32> to vector<8x64xf32>
    %cst_56 = arith.constant dense<0.000000e+00> : vector<8x64xf32>
    %171 = tpu.matmul %168, %0, %cst_56 {dimension_numbers = #tpu.dot_dimension_numbers<[1], [0], [0], [1], [0, 0, 1, 1], [], []>} : vector<8x32xf32>, vector<32x64xf32>, vector<8x64xf32> -> vector<8x64xf32>
    %172 = arith.addf %170, %171 : vector<8x64xf32>
    %173 = vector.extract_strided_slice %172 {offsets = [0, 0], sizes = [8, 32], strides = [1, 1]} : vector<8x64xf32> to vector<8x32xf32>
    %cst_57 = arith.constant 0.000000e+00 : f32
    %174 = vector.broadcast %cst_57 : f32 to vector<8x32xf32>
    %175 = arith.subf %174, %173 : vector<8x32xf32>
    %176 = math.exp %175 : vector<8x32xf32>
    %cst_58 = arith.constant 1.000000e+00 : f32
    %177 = vector.broadcast %cst_58 : f32 to vector<8x32xf32>
    %178 = arith.addf %177, %176 : vector<8x32xf32>
    %179 = tpu.reciprocal %178 : vector<8x32xf32> -> vector<8x32xf32>
    %180 = vector.extract_strided_slice %172 {offsets = [0, 32], sizes = [8, 32], strides = [1, 1]} : vector<8x64xf32> to vector<8x32xf32>
    %cst_59 = arith.constant 0.000000e+00 : f32
    %181 = vector.broadcast %cst_59 : f32 to vector<8x32xf32>
    %182 = arith.subf %181, %180 : vector<8x32xf32>
    %183 = math.exp %182 : vector<8x32xf32>
    %cst_60 = arith.constant 1.000000e+00 : f32
    %184 = vector.broadcast %cst_60 : f32 to vector<8x32xf32>
    %185 = arith.addf %184, %183 : vector<8x32xf32>
    %186 = tpu.reciprocal %185 : vector<8x32xf32> -> vector<8x32xf32>
    %187 = vector.extract_strided_slice %169 {offsets = [0, 64], sizes = [8, 32], strides = [1, 1]} : vector<8x96xf32> to vector<8x32xf32>
    %188 = arith.mulf %179, %168 : vector<8x32xf32>
    %cst_61 = arith.constant dense<0.000000e+00> : vector<8x32xf32>
    %189 = tpu.matmul %188, %1, %cst_61 {dimension_numbers = #tpu.dot_dimension_numbers<[1], [0], [0], [1], [0, 0, 1, 1], [], []>} : vector<8x32xf32>, vector<32x32xf32>, vector<8x32xf32> -> vector<8x32xf32>
    %190 = arith.addf %187, %189 : vector<8x32xf32>
    %191 = math.tanh %190 : vector<8x32xf32>
    %192 = arith.mulf %186, %168 : vector<8x32xf32>
    %cst_62 = arith.constant 1.000000e+00 : f32
    %193 = vector.broadcast %cst_62 : f32 to vector<8x32xf32>
    %194 = arith.subf %193, %186 : vector<8x32xf32>
    %195 = arith.mulf %194, %191 : vector<8x32xf32>
    %196 = arith.addf %192, %195 : vector<8x32xf32>
    %cst_63 = arith.constant -5.000000e+00 : f32
    %cst_64 = arith.constant 5.000000e+00 : f32
    %197 = vector.broadcast %cst_63 : f32 to vector<8x32xf32>
    %198 = arith.maximumf %197, %196 : vector<8x32xf32>
    %199 = vector.broadcast %cst_64 : f32 to vector<8x32xf32>
    %200 = arith.minimumf %199, %198 : vector<8x32xf32>
    %201 = vector.extract_strided_slice %7 {offsets = [48, 0], sizes = [8, 96], strides = [1, 1]} : vector<64x96xf32> to vector<8x96xf32>
    %202 = vector.extract_strided_slice %201 {offsets = [0, 0], sizes = [8, 64], strides = [1, 1]} : vector<8x96xf32> to vector<8x64xf32>
    %cst_65 = arith.constant dense<0.000000e+00> : vector<8x64xf32>
    %203 = tpu.matmul %200, %0, %cst_65 {dimension_numbers = #tpu.dot_dimension_numbers<[1], [0], [0], [1], [0, 0, 1, 1], [], []>} : vector<8x32xf32>, vector<32x64xf32>, vector<8x64xf32> -> vector<8x64xf32>
    %204 = arith.addf %202, %203 : vector<8x64xf32>
    %205 = vector.extract_strided_slice %204 {offsets = [0, 0], sizes = [8, 32], strides = [1, 1]} : vector<8x64xf32> to vector<8x32xf32>
    %cst_66 = arith.constant 0.000000e+00 : f32
    %206 = vector.broadcast %cst_66 : f32 to vector<8x32xf32>
    %207 = arith.subf %206, %205 : vector<8x32xf32>
    %208 = math.exp %207 : vector<8x32xf32>
    %cst_67 = arith.constant 1.000000e+00 : f32
    %209 = vector.broadcast %cst_67 : f32 to vector<8x32xf32>
    %210 = arith.addf %209, %208 : vector<8x32xf32>
    %211 = tpu.reciprocal %210 : vector<8x32xf32> -> vector<8x32xf32>
    %212 = vector.extract_strided_slice %204 {offsets = [0, 32], sizes = [8, 32], strides = [1, 1]} : vector<8x64xf32> to vector<8x32xf32>
    %cst_68 = arith.constant 0.000000e+00 : f32
    %213 = vector.broadcast %cst_68 : f32 to vector<8x32xf32>
    %214 = arith.subf %213, %212 : vector<8x32xf32>
    %215 = math.exp %214 : vector<8x32xf32>
    %cst_69 = arith.constant 1.000000e+00 : f32
    %216 = vector.broadcast %cst_69 : f32 to vector<8x32xf32>
    %217 = arith.addf %216, %215 : vector<8x32xf32>
    %218 = tpu.reciprocal %217 : vector<8x32xf32> -> vector<8x32xf32>
    %219 = vector.extract_strided_slice %201 {offsets = [0, 64], sizes = [8, 32], strides = [1, 1]} : vector<8x96xf32> to vector<8x32xf32>
    %220 = arith.mulf %211, %200 : vector<8x32xf32>
    %cst_70 = arith.constant dense<0.000000e+00> : vector<8x32xf32>
    %221 = tpu.matmul %220, %1, %cst_70 {dimension_numbers = #tpu.dot_dimension_numbers<[1], [0], [0], [1], [0, 0, 1, 1], [], []>} : vector<8x32xf32>, vector<32x32xf32>, vector<8x32xf32> -> vector<8x32xf32>
    %222 = arith.addf %219, %221 : vector<8x32xf32>
    %223 = math.tanh %222 : vector<8x32xf32>
    %224 = arith.mulf %218, %200 : vector<8x32xf32>
    %cst_71 = arith.constant 1.000000e+00 : f32
    %225 = vector.broadcast %cst_71 : f32 to vector<8x32xf32>
    %226 = arith.subf %225, %218 : vector<8x32xf32>
    %227 = arith.mulf %226, %223 : vector<8x32xf32>
    %228 = arith.addf %224, %227 : vector<8x32xf32>
    %cst_72 = arith.constant -5.000000e+00 : f32
    %cst_73 = arith.constant 5.000000e+00 : f32
    %229 = vector.broadcast %cst_72 : f32 to vector<8x32xf32>
    %230 = arith.maximumf %229, %228 : vector<8x32xf32>
    %231 = vector.broadcast %cst_73 : f32 to vector<8x32xf32>
    %232 = arith.minimumf %231, %230 : vector<8x32xf32>
    %233 = vector.extract_strided_slice %7 {offsets = [56, 0], sizes = [8, 96], strides = [1, 1]} : vector<64x96xf32> to vector<8x96xf32>
    %234 = vector.extract_strided_slice %233 {offsets = [0, 0], sizes = [8, 64], strides = [1, 1]} : vector<8x96xf32> to vector<8x64xf32>
    %cst_74 = arith.constant dense<0.000000e+00> : vector<8x64xf32>
    %235 = tpu.matmul %232, %0, %cst_74 {dimension_numbers = #tpu.dot_dimension_numbers<[1], [0], [0], [1], [0, 0, 1, 1], [], []>} : vector<8x32xf32>, vector<32x64xf32>, vector<8x64xf32> -> vector<8x64xf32>
    %236 = arith.addf %234, %235 : vector<8x64xf32>
    %237 = vector.extract_strided_slice %236 {offsets = [0, 0], sizes = [8, 32], strides = [1, 1]} : vector<8x64xf32> to vector<8x32xf32>
    %cst_75 = arith.constant 0.000000e+00 : f32
    %238 = vector.broadcast %cst_75 : f32 to vector<8x32xf32>
    %239 = arith.subf %238, %237 : vector<8x32xf32>
    %240 = math.exp %239 : vector<8x32xf32>
    %cst_76 = arith.constant 1.000000e+00 : f32
    %241 = vector.broadcast %cst_76 : f32 to vector<8x32xf32>
    %242 = arith.addf %241, %240 : vector<8x32xf32>
    %243 = tpu.reciprocal %242 : vector<8x32xf32> -> vector<8x32xf32>
    %244 = vector.extract_strided_slice %236 {offsets = [0, 32], sizes = [8, 32], strides = [1, 1]} : vector<8x64xf32> to vector<8x32xf32>
    %cst_77 = arith.constant 0.000000e+00 : f32
    %245 = vector.broadcast %cst_77 : f32 to vector<8x32xf32>
    %246 = arith.subf %245, %244 : vector<8x32xf32>
    %247 = math.exp %246 : vector<8x32xf32>
    %cst_78 = arith.constant 1.000000e+00 : f32
    %248 = vector.broadcast %cst_78 : f32 to vector<8x32xf32>
    %249 = arith.addf %248, %247 : vector<8x32xf32>
    %250 = tpu.reciprocal %249 : vector<8x32xf32> -> vector<8x32xf32>
    %251 = vector.extract_strided_slice %233 {offsets = [0, 64], sizes = [8, 32], strides = [1, 1]} : vector<8x96xf32> to vector<8x32xf32>
    %252 = arith.mulf %243, %232 : vector<8x32xf32>
    %cst_79 = arith.constant dense<0.000000e+00> : vector<8x32xf32>
    %253 = tpu.matmul %252, %1, %cst_79 {dimension_numbers = #tpu.dot_dimension_numbers<[1], [0], [0], [1], [0, 0, 1, 1], [], []>} : vector<8x32xf32>, vector<32x32xf32>, vector<8x32xf32> -> vector<8x32xf32>
    %254 = arith.addf %251, %253 : vector<8x32xf32>
    %255 = math.tanh %254 : vector<8x32xf32>
    %256 = arith.mulf %250, %232 : vector<8x32xf32>
    %cst_80 = arith.constant 1.000000e+00 : f32
    %257 = vector.broadcast %cst_80 : f32 to vector<8x32xf32>
    %258 = arith.subf %257, %250 : vector<8x32xf32>
    %259 = arith.mulf %258, %255 : vector<8x32xf32>
    %260 = arith.addf %256, %259 : vector<8x32xf32>
    %cst_81 = arith.constant -5.000000e+00 : f32
    %cst_82 = arith.constant 5.000000e+00 : f32
    %261 = vector.broadcast %cst_81 : f32 to vector<8x32xf32>
    %262 = arith.maximumf %261, %260 : vector<8x32xf32>
    %263 = vector.broadcast %cst_82 : f32 to vector<8x32xf32>
    %264 = arith.minimumf %263, %262 : vector<8x32xf32>
    %265 = tpu.concatenate %40, %72, %104, %136, %168, %200, %232, %264 in 0 : vector<8x32xf32>, vector<8x32xf32>, vector<8x32xf32>, vector<8x32xf32>, vector<8x32xf32>, vector<8x32xf32>, vector<8x32xf32>, vector<8x32xf32> -> vector<64x32xf32>
    %c0_83 = arith.constant 0 : index
    %c0_84 = arith.constant 0 : index
    %266 = vector.load %arg6[%c0_83, %c0_84] : memref<32x16xf32, #tpu.memory_space<vmem>>, vector<32x16xf32>
    %cst_85 = arith.constant dense<0.000000e+00> : vector<64x16xf32>
    %267 = tpu.matmul %265, %266, %cst_85 {dimension_numbers = #tpu.dot_dimension_numbers<[1], [0], [0], [1], [0, 0, 1, 1], [], []>} : vector<64x32xf32>, vector<32x16xf32>, vector<64x16xf32> -> vector<64x16xf32>
    %c0_86 = arith.constant 0 : index
    %c0_87 = arith.constant 0 : index
    %268 = vector.load %arg7[%c0_86, %c0_87] : memref<1x16xf32, #tpu.memory_space<vmem>>, vector<1x16xf32>
    %269 = vector.broadcast %268 : vector<1x16xf32> to vector<64x16xf32>
    %270 = arith.addf %267, %269 : vector<64x16xf32>
    %271 = vector.extract_strided_slice %270 {offsets = [0, 0], sizes = [8, 16], strides = [1, 1]} : vector<64x16xf32> to vector<8x16xf32>
    %272 = vector.extract_strided_slice %270 {offsets = [8, 0], sizes = [8, 16], strides = [1, 1]} : vector<64x16xf32> to vector<8x16xf32>
    %273 = vector.extract_strided_slice %270 {offsets = [16, 0], sizes = [8, 16], strides = [1, 1]} : vector<64x16xf32> to vector<8x16xf32>
    %274 = vector.extract_strided_slice %270 {offsets = [24, 0], sizes = [8, 16], strides = [1, 1]} : vector<64x16xf32> to vector<8x16xf32>
    %275 = vector.extract_strided_slice %270 {offsets = [32, 0], sizes = [8, 16], strides = [1, 1]} : vector<64x16xf32> to vector<8x16xf32>
    %276 = vector.extract_strided_slice %270 {offsets = [40, 0], sizes = [8, 16], strides = [1, 1]} : vector<64x16xf32> to vector<8x16xf32>
    %277 = vector.extract_strided_slice %270 {offsets = [48, 0], sizes = [8, 16], strides = [1, 1]} : vector<64x16xf32> to vector<8x16xf32>
    %278 = vector.extract_strided_slice %270 {offsets = [56, 0], sizes = [8, 16], strides = [1, 1]} : vector<64x16xf32> to vector<8x16xf32>
    %279 = tpu.concatenate %271, %272, %273, %274, %275, %276, %277, %278, %40, %72, %104, %136, %168, %200, %232, %264 in 1 : vector<8x16xf32>, vector<8x16xf32>, vector<8x16xf32>, vector<8x16xf32>, vector<8x16xf32>, vector<8x16xf32>, vector<8x16xf32>, vector<8x16xf32>, vector<8x32xf32>, vector<8x32xf32>, vector<8x32xf32>, vector<8x32xf32>, vector<8x32xf32>, vector<8x32xf32>, vector<8x32xf32>, vector<8x32xf32> -> vector<8x384xf32>
    %c0_88 = arith.constant 0 : index
    %c0_89 = arith.constant 0 : index
    %280 = vector.load %arg8[%c0_88, %c0_89] : memref<8x384xf32, #tpu.memory_space<vmem>>, vector<8x384xf32>
    tpu.vector_store %arg8[%c0_88, %c0_89], %279 {strides = array<i32>} : memref<8x384xf32, #tpu.memory_space<vmem>>, vector<8x384xf32>,
    return
  }
}

</mosaic_0001>

<llo_original>
// kernel: tpu_custom_call.1
$region0: #{tpu_custom_call.1}
  #allocation0 [shape = 'u32[]', space=smem, size = 0x4, offset = 0x4, fixed_abs, tag = 'smem constant byte address 0x4 - core index']
  #allocation1 [shape = 'u32[144,128]{1,0:T(1,128)}', space=vmem, size = 0x12000, scoped, tag = 'internal scratch']
  %s0 = inlined_call_operand.vmem [shape: f32[64,16], index: 0, kind: input, shape index: {}]
  %s1 = inlined_call_operand.vmem [shape: f32[8,32], index: 1, kind: input, shape index: {}]
  %s2 = inlined_call_operand.vmem [shape: f32[16,96], index: 2, kind: input, shape index: {}]
  %s3 = inlined_call_operand.vmem [shape: f32[1,96], index: 3, kind: input, shape index: {}]
  %s4 = inlined_call_operand.vmem [shape: f32[32,64], index: 4, kind: input, shape index: {}]
  %s5 = inlined_call_operand.vmem [shape: f32[32,32], index: 5, kind: input, shape index: {}]
  %s6 = inlined_call_operand.vmem [shape: f32[32,16], index: 6, kind: input, shape index: {}]
  %s7 = inlined_call_operand.vmem [shape: f32[1,16], index: 7, kind: input, shape index: {}]
  %s8 = inlined_call_operand.hbm [shape: f32[8,384], index: 8, kind: output, shape index: {}]
  %s9 = sld [smem:[#allocation0]]
  $region42: #{tpu_custom_call.1} parent=0
    _
  %s11 = ssub.s32 1, %s9
  %s12 = scalar_select 0, %s11, %s9
  $region1: #{tpu_custom_call.1} parent=0
    #allocation2 [shape = 'u8[12288]{0}', space=vmem, size = 0x3000, scoped, tag = 'output window, operand 0, single buffered']
    #allocation3 [shape = 's32[1]{0}', space=sflag, size = 0x4, scoped, tag = 'scoped memory for tpu_custom_call.1']
    %13 = vsyncpa [#allocation3], 0
    // Predicated region
    $region2: #{tpu_custom_call.1} parent=1 // pred_check
      _
    $region3: #{tpu_custom_call.1} parent=1 // pred_check_branch
      %15 = sbr.rel (0) target = $region5
    $region4: #{tpu_custom_call.1} parent=1 // pred_region
      _
    $region5: #{tpu_custom_call.1} parent=1 // pred_fallthru
      _
    // Predicated region
    $region6: #{tpu_custom_call.1} parent=1 // pred_check
      _
    $region7: #{tpu_custom_call.1} parent=1 // pred_check_branch
      %17 = sbr.rel (0) target = $region9
    $region8: #{tpu_custom_call.1} parent=1 // pred_region
      _
    $region9: #{tpu_custom_call.1} parent=1 // pred_fallthru
      _
    // Predicated region
    $region10: #{tpu_custom_call.1} parent=1 // pred_check
      _
    $region11: #{tpu_custom_call.1} parent=1 // pred_check_branch
      %19 = sbr.rel (0) target = $region13
    $region12: #{tpu_custom_call.1} parent=1 // pred_region
      _
    $region13: #{tpu_custom_call.1} parent=1 // pred_fallthru
      _
    // Predicated region
    $region14: #{tpu_custom_call.1} parent=1 // pred_check
      _
    $region15: #{tpu_custom_call.1} parent=1 // pred_check_branch
      %21 = sbr.rel (0) target = $region17
    $region16: #{tpu_custom_call.1} parent=1 // pred_region
      _
    $region17: #{tpu_custom_call.1} parent=1 // pred_fallthru
      _
    // Predicated region
    $region18: #{tpu_custom_call.1} parent=1 // pred_check
      _
    $region19: #{tpu_custom_call.1} parent=1 // pred_check_branch
      %23 = sbr.rel (0) target = $region21
    $region20: #{tpu_custom_call.1} parent=1 // pred_region
      _
    $region21: #{tpu_custom_call.1} parent=1 // pred_fallthru
      _
    // Predicated region
    $region22: #{tpu_custom_call.1} parent=1 // pred_check
      _
    $region23: #{tpu_custom_call.1} parent=1 // pred_check_branch
      %25 = sbr.rel (0) target = $region25
    $region24: #{tpu_custom_call.1} parent=1 // pred_region
      _
    $region25: #{tpu_custom_call.1} parent=1 // pred_fallthru
      _
    // Predicated region
    $region26: #{tpu_custom_call.1} parent=1 // pred_check
      _
    $region27: #{tpu_custom_call.1} parent=1 // pred_check_branch
      %27 = sbr.rel (0) target = $region29
    $region28: #{tpu_custom_call.1} parent=1 // pred_region
      _
    $region29: #{tpu_custom_call.1} parent=1 // pred_fallthru
      _
    // Predicated region
    $region30: #{tpu_custom_call.1} parent=1 // pred_check
      _
    $region31: #{tpu_custom_call.1} parent=1 // pred_check_branch
      %29 = sbr.rel (0) target = $region33
    $region32: #{tpu_custom_call.1} parent=1 // pred_region
      _
    $region33: #{tpu_custom_call.1} parent=1 // pred_fallthru
      _
    %v30 = vld [vmem:[%s4] sm:$0xff]
    %v31 = vld [vmem:[%s4 + $0x8] sm:$0xff]
    %v32 = vld [vmem:[%s4 + $0x10] sm:$0xff]
    %v33 = vld [vmem:[%s4 + $0x18] sm:$0xff]
    %v34 = vld [vmem:[%s5] sm:$0xff]
    %v35 = vld [vmem:[%s5 + $0x8] sm:$0xff]
    %v36 = vld [vmem:[%s5 + $0x10] sm:$0xff]
    %v37 = vld [vmem:[%s5 + $0x18] sm:$0xff]
    %v38 = vld [vmem:[%s0] sm:$0xff]
    %v39 = vld [vmem:[%s0 + $0x8] sm:$0xff]
    %v40 = vld [vmem:[%s0 + $0x10] sm:$0xff]
    %v41 = vld [vmem:[%s0 + $0x18] sm:$0xff]
    %v42 = vld [vmem:[%s0 + $0x20] sm:$0xff]
    %v43 = vld [vmem:[%s0 + $0x28] sm:$0xff]
    %v44 = vld [vmem:[%s0 + $0x30] sm:$0xff]
    %v45 = vld [vmem:[%s0 + $0x38] sm:$0xff]
    %v46 = vld [vmem:[%s2] sm:$0xff]
    %v47 = vld [vmem:[%s2 + $0x8] sm:$0xff]
    %v48 = vld [vmem:[%s3] sm:$0x1]
    %v50 = vlaneseq
    %v51 = vshrl.u32 %v50, 7
    %v52 = vsub.s32 0, %v51
    %v53 = vrot.slane %v48, %v52
    %vm55 = vcmask 130048
    %v57 = vsel %vm55, %v38, 0
    %v60 = vsel %vm55, %v39, 0
    %v63 = vsel %vm55, %v40, 0
    %v66 = vsel %vm55, %v41, 0
    %v69 = vsel %vm55, %v42, 0
    %v72 = vsel %vm55, %v43, 0
    %v75 = vsel %vm55, %v44, 0
    %v78 = vsel %vm55, %v45, 0
    %80 = vmatprep.subr.mxu0 0.0
    %81 = vmatpush1.msra.mxu0 0.0
    %82 = vmatprep.subr.mxu0 0.0
    %83 = vmatpush1.msra.mxu0 0.0
    %84 = vmatprep.subr.mxu0 0.0
    %85 = vmatpush1.msra.mxu0 0.0
    %86 = vmatprep.subr.mxu0 0.0
    %87 = vmatpush1.msra.mxu0 0.0
    %88 = vmatprep.subr.mxu0 0.0
    %89 = vmatpush1.msra.mxu0 0.0
    %90 = vmatprep.subr.mxu0 0.0
    %91 = vmatpush1.msra.mxu0 0.0
    %92 = vmatprep.subr.mxu0 0.0
    %93 = vmatpush1.msra.mxu0 0.0
    %94 = vmatprep.subr.mxu0 0.0
    %95 = vmatpush1.msra.mxu0 0.0
    %96 = vmatprep.subr.mxu0 0.0
    %97 = vmatpush1.msra.mxu0 0.0
    %98 = vmatprep.subr.mxu0 0.0
    %99 = vmatpush1.msra.mxu0 0.0
    %100 = vmatprep.subr.mxu0 0.0
    %101 = vmatpush1.msra.mxu0 0.0
    %102 = vmatprep.subr.mxu0 0.0
    %103 = vmatpush1.msra.mxu0 0.0
    %104 = vmatprep.subr.mxu0 0.0
    %105 = vmatpush1.msra.mxu0 0.0
    %106 = vmatprep.subr.mxu0 0.0
    %107 = vmatpush1.msra.mxu0 0.0
    %108 = vmatprep.subr.mxu0 0.0
    %109 = vmatpush1.msra.mxu0 %v47
    %110 = vmatprep.subr.mxu0 0.0
    %111 = vmatpush1.msra.mxu0 %v46
    %112 = vmatprep.subr.mxu0 0.0
    %113 = vmatpush2.msra.mxu0 0.0
    %114 = vmatprep.subr.mxu0 0.0
    %115 = vmatpush2.msra.mxu0 0.0
    %116 = vmatprep.subr.mxu0 0.0
    %117 = vmatpush2.msra.mxu0 0.0
    %118 = vmatprep.subr.mxu0 0.0
    %119 = vmatpush2.msra.mxu0 0.0
    %120 = vmatprep.subr.mxu0 0.0
    %121 = vmatpush2.msra.mxu0 0.0
    %122 = vmatprep.subr.mxu0 0.0
    %123 = vmatpush2.msra.mxu0 0.0
    %124 = vmatprep.subr.mxu0 0.0
    %125 = vmatpush2.msra.mxu0 0.0
    %126 = vmatprep.subr.mxu0 0.0
    %127 = vmatpush2.msra.mxu0 0.0
    %128 = vmatprep.subr.mxu0 0.0
    %129 = vmatpush2.msra.mxu0 0.0
    %130 = vmatprep.subr.mxu0 0.0
    %131 = vmatpush2.msra.mxu0 0.0
    %132 = vmatprep.subr.mxu0 0.0
    %133 = vmatpush2.msra.mxu0 0.0
    %134 = vmatprep.subr.mxu0 0.0
    %135 = vmatpush2.msra.mxu0 0.0
    %136 = vmatprep.subr.mxu0 0.0
    %137 = vmatpush2.msra.mxu0 0.0
    %138 = vmatprep.subr.mxu0 0.0
    %139 = vmatpush2.msra.mxu0 0.0
    %140 = vmatprep.subr.mxu0 0.0
    %141 = vmatpush2.msra.mxu0 0.0
    %142 = vmatprep.subr.mxu0 0.0
    %143 = vmatpush2.msra.mxu0 0.0
    %144 = vmatprep.mubr.f32.mxu0 0.0
    %145 = vmatmul.mubr.f32.gmra.mxu0 %v57
    %v146 = vpop.f32.mrf.mxu0
    %v147 = vadd.f32 %v53, %v146
    %v148 = vpop.f32.mrf.mxu0
    %149 = vmatprep.mubr.f32.mxu0 0.0
    %150 = vmatmul.mubr.f32.gmra.mxu0 %v60
    %v151 = vpop.f32.mrf.mxu0
    %v152 = vadd.f32 %v53, %v151
    %v153 = vpop.f32.mrf.mxu0
    %154 = vmatprep.mubr.f32.mxu0 0.0
    %155 = vmatmul.mubr.f32.gmra.mxu0 %v63
    %v156 = vpop.f32.mrf.mxu0
    %v157 = vadd.f32 %v53, %v156
    %v158 = vpop.f32.mrf.mxu0
    %159 = vmatprep.mubr.f32.mxu0 0.0
    %160 = vmatmul.mubr.f32.gmra.mxu0 %v66
    %v161 = vpop.f32.mrf.mxu0
    %v162 = vadd.f32 %v53, %v161
    %v163 = vpop.f32.mrf.mxu0
    %164 = vmatprep.mubr.f32.mxu0 0.0
    %165 = vmatmul.mubr.f32.gmra.mxu0 %v69
    %v166 = vpop.f32.mrf.mxu0
    %v167 = vadd.f32 %v53, %v166
    %v168 = vpop.f32.mrf.mxu0
    %169 = vmatprep.mubr.f32.mxu0 0.0
    %170 = vmatmul.mubr.f32.gmra.mxu0 %v72
    %v171 = vpop.f32.mrf.mxu0
    %v172 = vadd.f32 %v53, %v171
    %v173 = vpop.f32.mrf.mxu0
    %174 = vmatprep.mubr.f32.mxu0 0.0
    %175 = vmatmul.mubr.f32.gmra.mxu0 %v75
    %v176 = vpop.f32.mrf.mxu0
    %v177 = vadd.f32 %v53, %v176
    %v178 = vpop.f32.mrf.mxu0
    %179 = vmatprep.mubr.f32.mxu0 0.0
    %180 = vmatmul.mubr.f32.gmra.mxu0 %v78
    %v181 = vpop.f32.mrf.mxu0
    %v182 = vadd.f32 %v53, %v181
    %v183 = vpop.f32.mrf.mxu0
    %184 = vdwg.mxu0
    %v185 = vld [vmem:[%s1] sm:$0xff]
    %vm186 = vcmask 261120
    %v188 = vsel %vm186, %v185, 0
    %190 = vmatprep.subr.mxu0 0.0
    %191 = vmatpush1.msra.mxu0 0.0
    %192 = vmatprep.subr.mxu0 0.0
    %193 = vmatpush1.msra.mxu0 0.0
    %194 = vmatprep.subr.mxu0 0.0
    %195 = vmatpush1.msra.mxu0 0.0
    %196 = vmatprep.subr.mxu0 0.0
    %197 = vmatpush1.msra.mxu0 0.0
    %198 = vmatprep.subr.mxu0 0.0
    %199 = vmatpush1.msra.mxu0 0.0
    %200 = vmatprep.subr.mxu0 0.0
    %201 = vmatpush1.msra.mxu0 0.0
    %202 = vmatprep.subr.mxu0 0.0
    %203 = vmatpush1.msra.mxu0 0.0
    %204 = vmatprep.subr.mxu0 0.0
    %205 = vmatpush1.msra.mxu0 0.0
    %206 = vmatprep.subr.mxu0 0.0
    %207 = vmatpush1.msra.mxu0 0.0
    %208 = vmatprep.subr.mxu0 0.0
    %209 = vmatpush1.msra.mxu0 0.0
    %210 = vmatprep.subr.mxu0 0.0
    %211 = vmatpush1.msra.mxu0 0.0
    %212 = vmatprep.subr.mxu0 0.0
    %213 = vmatpush1.msra.mxu0 0.0
    %214 = vmatprep.subr.mxu0 0.0
    %215 = vmatpush1.msra.mxu0 %v33
    %216 = vmatprep.subr.mxu0 0.0
    %217 = vmatpush1.msra.mxu0 %v32
    %218 = vmatprep.subr.mxu0 0.0
    %219 = vmatpush1.msra.mxu0 %v31
    %220 = vmatprep.subr.mxu0 0.0
    %221 = vmatpush1.msra.mxu0 %v30
    %222 = vmatprep.subr.mxu0 0.0
    %223 = vmatpush2.msra.mxu0 0.0
    %224 = vmatprep.subr.mxu0 0.0
    %225 = vmatpush2.msra.mxu0 0.0
    %226 = vmatprep.subr.mxu0 0.0
    %227 = vmatpush2.msra.mxu0 0.0
    %228 = vmatprep.subr.mxu0 0.0
    %229 = vmatpush2.msra.mxu0 0.0
    %230 = vmatprep.subr.mxu0 0.0
    %231 = vmatpush2.msra.mxu0 0.0
    %232 = vmatprep.subr.mxu0 0.0
    %233 = vmatpush2.msra.mxu0 0.0
    %234 = vmatprep.subr.mxu0 0.0
    %235 = vmatpush2.msra.mxu0 0.0
    %236 = vmatprep.subr.mxu0 0.0
    %237 = vmatpush2.msra.mxu0 0.0
    %238 = vmatprep.subr.mxu0 0.0
    %239 = vmatpush2.msra.mxu0 0.0
    %240 = vmatprep.subr.mxu0 0.0
    %241 = vmatpush2.msra.mxu0 0.0
    %242 = vmatprep.subr.mxu0 0.0
    %243 = vmatpush2.msra.mxu0 0.0
    %244 = vmatprep.subr.mxu0 0.0
    %245 = vmatpush2.msra.mxu0 0.0
    %246 = vmatprep.subr.mxu0 0.0
    %247 = vmatpush2.msra.mxu0 0.0
    %248 = vmatprep.subr.mxu0 0.0
    %249 = vmatpush2.msra.mxu0 0.0
    %250 = vmatprep.subr.mxu0 0.0
    %251 = vmatpush2.msra.mxu0 0.0
    %252 = vmatprep.subr.mxu0 0.0
    %253 = vmatpush2.msra.mxu0 0.0
    %254 = vmatprep.mubr.f32.mxu0 0.0
    %255 = vmatmul.mubr.f32.gmra.mxu0 %v188
    %v256 = vpop.f32.mrf.mxu0
    %v257 = vadd.f32 0.0, %v256
    %v258 = vpop.f32.mrf.mxu0
    %259 = vdwg.mxu0
    %v260 = vadd.f32 %v147, %v257
    %v261 = vsub.f32 0.0, %v260
    %v262 = vmul.f32 %v261, 1.442695
    %v263 = vpow.pop %v262
    %v264 = vadd.f32 %v263, 1.0
    %v265 = vrcp.pop %v264
    %v266 = vmul.f32 %v265, %v185
    %v268 = vsel %vm186, %v266, 0
    %270 = vmatprep.subr.mxu0 0.0
    %271 = vmatpush1.msra.mxu0 0.0
    %272 = vmatprep.subr.mxu0 0.0
    %273 = vmatpush1.msra.mxu0 0.0
    %274 = vmatprep.subr.mxu0 0.0
    %275 = vmatpush1.msra.mxu0 0.0
    %276 = vmatprep.subr.mxu0 0.0
    %277 = vmatpush1.msra.mxu0 0.0
    %278 = vmatprep.subr.mxu0 0.0
    %279 = vmatpush1.msra.mxu0 0.0
    %280 = vmatprep.subr.mxu0 0.0
    %281 = vmatpush1.msra.mxu0 0.0
    %282 = vmatprep.subr.mxu0 0.0
    %283 = vmatpush1.msra.mxu0 0.0
    %284 = vmatprep.subr.mxu0 0.0
    %285 = vmatpush1.msra.mxu0 0.0
    %286 = vmatprep.subr.mxu0 0.0
    %287 = vmatpush1.msra.mxu0 0.0
    %288 = vmatprep.subr.mxu0 0.0
    %289 = vmatpush1.msra.mxu0 0.0
    %290 = vmatprep.subr.mxu0 0.0
    %291 = vmatpush1.msra.mxu0 0.0
    %292 = vmatprep.subr.mxu0 0.0
    %293 = vmatpush1.msra.mxu0 0.0
    %294 = vmatprep.subr.mxu0 0.0
    %295 = vmatpush1.msra.mxu0 %v37
    %296 = vmatprep.subr.mxu0 0.0
    %297 = vmatpush1.msra.mxu0 %v36
    %298 = vmatprep.subr.mxu0 0.0
    %299 = vmatpush1.msra.mxu0 %v35
    %300 = vmatprep.subr.mxu0 0.0
    %301 = vmatpush1.msra.mxu0 %v34
    %302 = vmatprep.subr.mxu0 0.0
    %303 = vmatpush2.msra.mxu0 0.0
    %304 = vmatprep.subr.mxu0 0.0
    %305 = vmatpush2.msra.mxu0 0.0
    %306 = vmatprep.subr.mxu0 0.0
    %307 = vmatpush2.msra.mxu0 0.0
    %308 = vmatprep.subr.mxu0 0.0
    %309 = vmatpush2.msra.mxu0 0.0
    %310 = vmatprep.subr.mxu0 0.0
    %311 = vmatpush2.msra.mxu0 0.0
    %312 = vmatprep.subr.mxu0 0.0
    %313 = vmatpush2.msra.mxu0 0.0
    %314 = vmatprep.subr.mxu0 0.0
    %315 = vmatpush2.msra.mxu0 0.0
    %316 = vmatprep.subr.mxu0 0.0
    %317 = vmatpush2.msra.mxu0 0.0
    %318 = vmatprep.subr.mxu0 0.0
    %319 = vmatpush2.msra.mxu0 0.0
    %320 = vmatprep.subr.mxu0 0.0
    %321 = vmatpush2.msra.mxu0 0.0
    %322 = vmatprep.subr.mxu0 0.0
    %323 = vmatpush2.msra.mxu0 0.0
    %324 = vmatprep.subr.mxu0 0.0
    %325 = vmatpush2.msra.mxu0 0.0
    %326 = vmatprep.subr.mxu0 0.0
    %327 = vmatpush2.msra.mxu0 0.0
    %328 = vmatprep.subr.mxu0 0.0
    %329 = vmatpush2.msra.mxu0 0.0
    %330 = vmatprep.subr.mxu0 0.0
    %331 = vmatpush2.msra.mxu0 0.0
    %332 = vmatprep.subr.mxu0 0.0
    %333 = vmatpush2.msra.mxu0 0.0
    %334 = vmatprep.mubr.f32.mxu0 0.0
    %335 = vmatmul.mubr.f32.gmra.mxu0 %v268
    %v336 = vpop.f32.mrf.mxu0
    %v337 = vadd.f32 0.0, %v336
    %v338 = vpop.f32.mrf.mxu0
    %339 = vdwg.mxu0
    %341 = vrot.lane.b32.xlu0 %v337, 64
    %v342 = vpop.permute.xlu0 %341
    %v344 = vadd.f32 %v147, %v342
    %v345 = vtanh.pop %v344
    %346 = vrot.lane.b32.xlu0 %v185, 32
    %v347 = vpop.permute.xlu0 %346
    %v349 = vmul.f32 %v265, %v347
    %v350 = vsub.f32 1.0, %v265
    %352 = vrot.lane.b32.xlu0 %v345, 96
    %v353 = vpop.permute.xlu0 %352
    %v355 = vmul.f32 %v350, %v353
    %v356 = vadd.f32 %v349, %v355
    %v357 = vmax.f32 %v356, -5.0
    %v358 = vmin.f32 %v357, 5.0
    %360 = vrot.lane.b32.xlu0 %v358, 96
    %v361 = vpop.permute.xlu0 %360
    %v362 = vsel %vm186, %v361, 0
    %364 = vmatprep.subr.mxu0 0.0
    %365 = vmatpush1.msra.mxu0 0.0
    %366 = vmatprep.subr.mxu0 0.0
    %367 = vmatpush1.msra.mxu0 0.0
    %368 = vmatprep.subr.mxu0 0.0
    %369 = vmatpush1.msra.mxu0 0.0
    %370 = vmatprep.subr.mxu0 0.0
    %371 = vmatpush1.msra.mxu0 0.0
    %372 = vmatprep.subr.mxu0 0.0
    %373 = vmatpush1.msra.mxu0 0.0
    %374 = vmatprep.subr.mxu0 0.0
    %375 = vmatpush1.msra.mxu0 0.0
    %376 = vmatprep.subr.mxu0 0.0
    %377 = vmatpush1.msra.mxu0 0.0
    %378 = vmatprep.subr.mxu0 0.0
    %379 = vmatpush1.msra.mxu0 0.0
    %380 = vmatprep.subr.mxu0 0.0
    %381 = vmatpush1.msra.mxu0 0.0
    %382 = vmatprep.subr.mxu0 0.0
    %383 = vmatpush1.msra.mxu0 0.0
    %384 = vmatprep.subr.mxu0 0.0
    %385 = vmatpush1.msra.mxu0 0.0
    %386 = vmatprep.subr.mxu0 0.0
    %387 = vmatpush1.msra.mxu0 0.0
    %388 = vmatprep.subr.mxu0 0.0
    %389 = vmatpush1.msra.mxu0 %v33
    %390 = vmatprep.subr.mxu0 0.0
    %391 = vmatpush1.msra.mxu0 %v32
    %392 = vmatprep.subr.mxu0 0.0
    %393 = vmatpush1.msra.mxu0 %v31
    %394 = vmatprep.subr.mxu0 0.0
    %395 = vmatpush1.msra.mxu0 %v30
    %396 = vmatprep.subr.mxu0 0.0
    %397 = vmatpush2.msra.mxu0 0.0
    %398 = vmatprep.subr.mxu0 0.0
    %399 = vmatpush2.msra.mxu0 0.0
    %400 = vmatprep.subr.mxu0 0.0
    %401 = vmatpush2.msra.mxu0 0.0
    %402 = vmatprep.subr.mxu0 0.0
    %403 = vmatpush2.msra.mxu0 0.0
    %404 = vmatprep.subr.mxu0 0.0
    %405 = vmatpush2.msra.mxu0 0.0
    %406 = vmatprep.subr.mxu0 0.0
    %407 = vmatpush2.msra.mxu0 0.0
    %408 = vmatprep.subr.mxu0 0.0
    %409 = vmatpush2.msra.mxu0 0.0
    %410 = vmatprep.subr.mxu0 0.0
    %411 = vmatpush2.msra.mxu0 0.0
    %412 = vmatprep.subr.mxu0 0.0
    %413 = vmatpush2.msra.mxu0 0.0
    %414 = vmatprep.subr.mxu0 0.0
    %415 = vmatpush2.msra.mxu0 0.0
    %416 = vmatprep.subr.mxu0 0.0
    %417 = vmatpush2.msra.mxu0 0.0
    %418 = vmatprep.subr.mxu0 0.0
    %419 = vmatpush2.msra.mxu0 0.0
    %420 = vmatprep.subr.mxu0 0.0
    %421 = vmatpush2.msra.mxu0 0.0
    %422 = vmatprep.subr.mxu0 0.0
    %423 = vmatpush2.msra.mxu0 0.0
    %424 = vmatprep.subr.mxu0 0.0
    %425 = vmatpush2.msra.mxu0 0.0
    %426 = vmatprep.subr.mxu0 0.0
    %427 = vmatpush2.msra.mxu0 0.0
    %428 = vmatprep.mubr.f32.mxu0 0.0
    %429 = vmatmul.mubr.f32.gmra.mxu0 %v362
    %v430 = vpop.f32.mrf.mxu0
    %v431 = vadd.f32 0.0, %v430
    %v432 = vpop.f32.mrf.mxu0
    %433 = vdwg.mxu0
    %v434 = vadd.f32 %v152, %v431
    %v435 = vsub.f32 0.0, %v434
    %v436 = vmul.f32 %v435, 1.442695
    %v437 = vpow.pop %v436
    %v438 = vadd.f32 %v437, 1.0
    %v439 = vrcp.pop %v438
    %v441 = vmul.f32 %v439, %v361
    %v443 = vsel %vm186, %v441, 0
    %445 = vmatprep.subr.mxu0 0.0
    %446 = vmatpush1.msra.mxu0 0.0
    %447 = vmatprep.subr.mxu0 0.0
    %448 = vmatpush1.msra.mxu0 0.0
    %449 = vmatprep.subr.mxu0 0.0
    %450 = vmatpush1.msra.mxu0 0.0
    %451 = vmatprep.subr.mxu0 0.0
    %452 = vmatpush1.msra.mxu0 0.0
    %453 = vmatprep.subr.mxu0 0.0
    %454 = vmatpush1.msra.mxu0 0.0
    %455 = vmatprep.subr.mxu0 0.0
    %456 = vmatpush1.msra.mxu0 0.0
    %457 = vmatprep.subr.mxu0 0.0
    %458 = vmatpush1.msra.mxu0 0.0
    %459 = vmatprep.subr.mxu0 0.0
    %460 = vmatpush1.msra.mxu0 0.0
    %461 = vmatprep.subr.mxu0 0.0
    %462 = vmatpush1.msra.mxu0 0.0
    %463 = vmatprep.subr.mxu0 0.0
    %464 = vmatpush1.msra.mxu0 0.0
    %465 = vmatprep.subr.mxu0 0.0
    %466 = vmatpush1.msra.mxu0 0.0
    %467 = vmatprep.subr.mxu0 0.0
    %468 = vmatpush1.msra.mxu0 0.0
    %469 = vmatprep.subr.mxu0 0.0
    %470 = vmatpush1.msra.mxu0 %v37
    %471 = vmatprep.subr.mxu0 0.0
    %472 = vmatpush1.msra.mxu0 %v36
    %473 = vmatprep.subr.mxu0 0.0
    %474 = vmatpush1.msra.mxu0 %v35
    %475 = vmatprep.subr.mxu0 0.0
    %476 = vmatpush1.msra.mxu0 %v34
    %477 = vmatprep.subr.mxu0 0.0
    %478 = vmatpush2.msra.mxu0 0.0
    %479 = vmatprep.subr.mxu0 0.0
    %480 = vmatpush2.msra.mxu0 0.0
    %481 = vmatprep.subr.mxu0 0.0
    %482 = vmatpush2.msra.mxu0 0.0
    %483 = vmatprep.subr.mxu0 0.0
    %484 = vmatpush2.msra.mxu0 0.0
    %485 = vmatprep.subr.mxu0 0.0
    %486 = vmatpush2.msra.mxu0 0.0
    %487 = vmatprep.subr.mxu0 0.0
    %488 = vmatpush2.msra.mxu0 0.0
    %489 = vmatprep.subr.mxu0 0.0
    %490 = vmatpush2.msra.mxu0 0.0
    %491 = vmatprep.subr.mxu0 0.0
    %492 = vmatpush2.msra.mxu0 0.0
    %493 = vmatprep.subr.mxu0 0.0
    %494 = vmatpush2.msra.mxu0 0.0
    %495 = vmatprep.subr.mxu0 0.0
    %496 = vmatpush2.msra.mxu0 0.0
    %497 = vmatprep.subr.mxu0 0.0
    %498 = vmatpush2.msra.mxu0 0.0
    %499 = vmatprep.subr.mxu0 0.0
    %500 = vmatpush2.msra.mxu0 0.0
    %501 = vmatprep.subr.mxu0 0.0
    %502 = vmatpush2.msra.mxu0 0.0
    %503 = vmatprep.subr.mxu0 0.0
    %504 = vmatpush2.msra.mxu0 0.0
    %505 = vmatprep.subr.mxu0 0.0
    %506 = vmatpush2.msra.mxu0 0.0
    %507 = vmatprep.subr.mxu0 0.0
    %508 = vmatpush2.msra.mxu0 0.0
    %509 = vmatprep.mubr.f32.mxu0 0.0
    %510 = vmatmul.mubr.f32.gmra.mxu0 %v443
    %v511 = vpop.f32.mrf.mxu0
    %v512 = vadd.f32 0.0, %v511
    %v513 = vpop.f32.mrf.mxu0
    %514 = vdwg.mxu0
    %516 = vrot.lane.b32.xlu0 %v512, 64
    %v517 = vpop.permute.xlu0 %516
    %v519 = vadd.f32 %v152, %v517
    %v520 = vtanh.pop %v519
    %v521 = vmul.f32 %v439, %v358
    %v522 = vsub.f32 1.0, %v439
    %524 = vrot.lane.b32.xlu0 %v520, 96
    %v525 = vpop.permute.xlu0 %524
    %v527 = vmul.f32 %v522, %v525
    %v528 = vadd.f32 %v521, %v527
    %v529 = vmax.f32 %v528, -5.0
    %v530 = vmin.f32 %v529, 5.0
    %532 = vrot.lane.b32.xlu0 %v530, 96
    %v533 = vpop.permute.xlu0 %532
    %v534 = vsel %vm186, %v533, 0
    %536 = vmatprep.subr.mxu0 0.0
    %537 = vmatpush1.msra.mxu0 0.0
    %538 = vmatprep.subr.mxu0 0.0
    %539 = vmatpush1.msra.mxu0 0.0
    %540 = vmatprep.subr.mxu0 0.0
    %541 = vmatpush1.msra.mxu0 0.0
    %542 = vmatprep.subr.mxu0 0.0
    %543 = vmatpush1.msra.mxu0 0.0
    %544 = vmatprep.subr.mxu0 0.0
    %545 = vmatpush1.msra.mxu0 0.0
    %546 = vmatprep.subr.mxu0 0.0
    %547 = vmatpush1.msra.mxu0 0.0
    %548 = vmatprep.subr.mxu0 0.0
    %549 = vmatpush1.msra.mxu0 0.0
    %550 = vmatprep.subr.mxu0 0.0
    %551 = vmatpush1.msra.mxu0 0.0
    %552 = vmatprep.subr.mxu0 0.0
    %553 = vmatpush1.msra.mxu0 0.0
    %554 = vmatprep.subr.mxu0 0.0
    %555 = vmatpush1.msra.mxu0 0.0
    %556 = vmatprep.subr.mxu0 0.0
    %557 = vmatpush1.msra.mxu0 0.0
    %558 = vmatprep.subr.mxu0 0.0
    %559 = vmatpush1.msra.mxu0 0.0
    %560 = vmatprep.subr.mxu0 0.0
    %561 = vmatpush1.msra.mxu0 %v33
    %562 = vmatprep.subr.mxu0 0.0
    %563 = vmatpush1.msra.mxu0 %v32
    %564 = vmatprep.subr.mxu0 0.0
    %565 = vmatpush1.msra.mxu0 %v31
    %566 = vmatprep.subr.mxu0 0.0
    %567 = vmatpush1.msra.mxu0 %v30
    %568 = vmatprep.subr.mxu0 0.0
    %569 = vmatpush2.msra.mxu0 0.0
    %570 = vmatprep.subr.mxu0 0.0
    %571 = vmatpush2.msra.mxu0 0.0
    %572 = vmatprep.subr.mxu0 0.0
    %573 = vmatpush2.msra.mxu0 0.0
    %574 = vmatprep.subr.mxu0 0.0
    %575 = vmatpush2.msra.mxu0 0.0
    %576 = vmatprep.subr.mxu0 0.0
    %577 = vmatpush2.msra.mxu0 0.0
    %578 = vmatprep.subr.mxu0 0.0
    %579 = vmatpush2.msra.mxu0 0.0
    %580 = vmatprep.subr.mxu0 0.0
    %581 = vmatpush2.msra.mxu0 0.0
    %582 = vmatprep.subr.mxu0 0.0
    %583 = vmatpush2.msra.mxu0 0.0
    %584 = vmatprep.subr.mxu0 0.0
    %585 = vmatpush2.msra.mxu0 0.0
    %586 = vmatprep.subr.mxu0 0.0
    %587 = vmatpush2.msra.mxu0 0.0
    %588 = vmatprep.subr.mxu0 0.0
    %589 = vmatpush2.msra.mxu0 0.0
    %590 = vmatprep.subr.mxu0 0.0
    %591 = vmatpush2.msra.mxu0 0.0
    %592 = vmatprep.subr.mxu0 0.0
    %593 = vmatpush2.msra.mxu0 0.0
    %594 = vmatprep.subr.mxu0 0.0
    %595 = vmatpush2.msra.mxu0 0.0
    %596 = vmatprep.subr.mxu0 0.0
    %597 = vmatpush2.msra.mxu0 0.0
    %598 = vmatprep.subr.mxu0 0.0
    %599 = vmatpush2.msra.mxu0 0.0
    %600 = vmatprep.mubr.f32.mxu0 0.0
    %601 = vmatmul.mubr.f32.gmra.mxu0 %v534
    %v602 = vpop.f32.mrf.mxu0
    %v603 = vadd.f32 0.0, %v602
    %v604 = vpop.f32.mrf.mxu0
    %605 = vdwg.mxu0
    %v606 = vadd.f32 %v157, %v603
    %v607 = vsub.f32 0.0, %v606
    %v608 = vmul.f32 %v607, 1.442695
    %v609 = vpow.pop %v608
    %v610 = vadd.f32 %v609, 1.0
    %v611 = vrcp.pop %v610
    %v613 = vmul.f32 %v611, %v533
    %v615 = vsel %vm186, %v613, 0
    %617 = vmatprep.subr.mxu0 0.0
    %618 = vmatpush1.msra.mxu0 0.0
    %619 = vmatprep.subr.mxu0 0.0
    %620 = vmatpush1.msra.mxu0 0.0
    %621 = vmatprep.subr.mxu0 0.0
    %622 = vmatpush1.msra.mxu0 0.0
    %623 = vmatprep.subr.mxu0 0.0
    %624 = vmatpush1.msra.mxu0 0.0
    %625 = vmatprep.subr.mxu0 0.0
    %626 = vmatpush1.msra.mxu0 0.0
    %627 = vmatprep.subr.mxu0 0.0
    %628 = vmatpush1.msra.mxu0 0.0
    %629 = vmatprep.subr.mxu0 0.0
    %630 = vmatpush1.msra.mxu0 0.0
    %631 = vmatprep.subr.mxu0 0.0
    %632 = vmatpush1.msra.mxu0 0.0
    %633 = vmatprep.subr.mxu0 0.0
    %634 = vmatpush1.msra.mxu0 0.0
    %635 = vmatprep.subr.mxu0 0.0
    %636 = vmatpush1.msra.mxu0 0.0
    %637 = vmatprep.subr.mxu0 0.0
    %638 = vmatpush1.msra.mxu0 0.0
    %639 = vmatprep.subr.mxu0 0.0
    %640 = vmatpush1.msra.mxu0 0.0
    %641 = vmatprep.subr.mxu0 0.0
    %642 = vmatpush1.msra.mxu0 %v37
    %643 = vmatprep.subr.mxu0 0.0
    %644 = vmatpush1.msra.mxu0 %v36
    %645 = vmatprep.subr.mxu0 0.0
    %646 = vmatpush1.msra.mxu0 %v35
    %647 = vmatprep.subr.mxu0 0.0
    %648 = vmatpush1.msra.mxu0 %v34
    %649 = vmatprep.subr.mxu0 0.0
    %650 = vmatpush2.msra.mxu0 0.0
    %651 = vmatprep.subr.mxu0 0.0
    %652 = vmatpush2.msra.mxu0 0.0
    %653 = vmatprep.subr.mxu0 0.0
    %654 = vmatpush2.msra.mxu0 0.0
    %655 = vmatprep.subr.mxu0 0.0
    %656 = vmatpush2.msra.mxu0 0.0
    %657 = vmatprep.subr.mxu0 0.0
    %658 = vmatpush2.msra.mxu0 0.0
    %659 = vmatprep.subr.mxu0 0.0
    %660 = vmatpush2.msra.mxu0 0.0
    %661 = vmatprep.subr.mxu0 0.0
    %662 = vmatpush2.msra.mxu0 0.0
    %663 = vmatprep.subr.mxu0 0.0
    %664 = vmatpush2.msra.mxu0 0.0
    %665 = vmatprep.subr.mxu0 0.0
    %666 = vmatpush2.msra.mxu0 0.0
    %667 = vmatprep.subr.mxu0 0.0
    %668 = vmatpush2.msra.mxu0 0.0
    %669 = vmatprep.subr.mxu0 0.0
    %670 = vmatpush2.msra.mxu0 0.0
    %671 = vmatprep.subr.mxu0 0.0
    %672 = vmatpush2.msra.mxu0 0.0
    %673 = vmatprep.subr.mxu0 0.0
    %674 = vmatpush2.msra.mxu0 0.0
    %675 = vmatprep.subr.mxu0 0.0
    %676 = vmatpush2.msra.mxu0 0.0
    %677 = vmatprep.subr.mxu0 0.0
    %678 = vmatpush2.msra.mxu0 0.0
    %679 = vmatprep.subr.mxu0 0.0
    %680 = vmatpush2.msra.mxu0 0.0
    %681 = vmatprep.mubr.f32.mxu0 0.0
    %682 = vmatmul.mubr.f32.gmra.mxu0 %v615
    %v683 = vpop.f32.mrf.mxu0
    %v684 = vadd.f32 0.0, %v683
    %v685 = vpop.f32.mrf.mxu0
    %686 = vdwg.mxu0
    %688 = vrot.lane.b32.xlu0 %v684, 64
    %v689 = vpop.permute.xlu0 %688
    %v691 = vadd.f32 %v157, %v689
    %v692 = vtanh.pop %v691
    %v693 = vmul.f32 %v611, %v530
    %v694 = vsub.f32 1.0, %v611
    %696 = vrot.lane.b32.xlu0 %v692, 96
    %v697 = vpop.permute.xlu0 %696
    %v699 = vmul.f32 %v694, %v697
    %v700 = vadd.f32 %v693, %v699
    %v701 = vmax.f32 %v700, -5.0
    %v702 = vmin.f32 %v701, 5.0
    %704 = vrot.lane.b32.xlu0 %v702, 96
    %v705 = vpop.permute.xlu0 %704
    %v706 = vsel %vm186, %v705, 0
    %708 = vmatprep.subr.mxu0 0.0
    %709 = vmatpush1.msra.mxu0 0.0
    %710 = vmatprep.subr.mxu0 0.0
    %711 = vmatpush1.msra.mxu0 0.0
    %712 = vmatprep.subr.mxu0 0.0
    %713 = vmatpush1.msra.mxu0 0.0
    %714 = vmatprep.subr.mxu0 0.0
    %715 = vmatpush1.msra.mxu0 0.0
    %716 = vmatprep.subr.mxu0 0.0
    %717 = vmatpush1.msra.mxu0 0.0
    %718 = vmatprep.subr.mxu0 0.0
    %719 = vmatpush1.msra.mxu0 0.0
    %720 = vmatprep.subr.mxu0 0.0
    %721 = vmatpush1.msra.mxu0 0.0
    %722 = vmatprep.subr.mxu0 0.0
    %723 = vmatpush1.msra.mxu0 0.0
    %724 = vmatprep.subr.mxu0 0.0
    %725 = vmatpush1.msra.mxu0 0.0
    %726 = vmatprep.subr.mxu0 0.0
    %727 = vmatpush1.msra.mxu0 0.0
    %728 = vmatprep.subr.mxu0 0.0
    %729 = vmatpush1.msra.mxu0 0.0
    %730 = vmatprep.subr.mxu0 0.0
    %731 = vmatpush1.msra.mxu0 0.0
    %732 = vmatprep.subr.mxu0 0.0
    %733 = vmatpush1.msra.mxu0 %v33
    %734 = vmatprep.subr.mxu0 0.0
    %735 = vmatpush1.msra.mxu0 %v32
    %736 = vmatprep.subr.mxu0 0.0
    %737 = vmatpush1.msra.mxu0 %v31
    %738 = vmatprep.subr.mxu0 0.0
    %739 = vmatpush1.msra.mxu0 %v30
    %740 = vmatprep.subr.mxu0 0.0
    %741 = vmatpush2.msra.mxu0 0.0
    %742 = vmatprep.subr.mxu0 0.0
    %743 = vmatpush2.msra.mxu0 0.0
    %744 = vmatprep.subr.mxu0 0.0
    %745 = vmatpush2.msra.mxu0 0.0
    %746 = vmatprep.subr.mxu0 0.0
    %747 = vmatpush2.msra.mxu0 0.0
    %748 = vmatprep.subr.mxu0 0.0
    %749 = vmatpush2.msra.mxu0 0.0
    %750 = vmatprep.subr.mxu0 0.0
    %751 = vmatpush2.msra.mxu0 0.0
    %752 = vmatprep.subr.mxu0 0.0
    %753 = vmatpush2.msra.mxu0 0.0
    %754 = vmatprep.subr.mxu0 0.0
    %755 = vmatpush2.msra.mxu0 0.0
    %756 = vmatprep.subr.mxu0 0.0
    %757 = vmatpush2.msra.mxu0 0.0
    %758 = vmatprep.subr.mxu0 0.0
    %759 = vmatpush2.msra.mxu0 0.0
    %760 = vmatprep.subr.mxu0 0.0
    %761 = vmatpush2.msra.mxu0 0.0
    %762 = vmatprep.subr.mxu0 0.0
    %763 = vmatpush2.msra.mxu0 0.0
    %764 = vmatprep.subr.mxu0 0.0
    %765 = vmatpush2.msra.mxu0 0.0
    %766 = vmatprep.subr.mxu0 0.0
    %767 = vmatpush2.msra.mxu0 0.0
    %768 = vmatprep.subr.mxu0 0.0
    %769 = vmatpush2.msra.mxu0 0.0
    %770 = vmatprep.subr.mxu0 0.0
    %771 = vmatpush2.msra.mxu0 0.0
    %772 = vmatprep.mubr.f32.mxu0 0.0
    %773 = vmatmul.mubr.f32.gmra.mxu0 %v706
    %v774 = vpop.f32.mrf.mxu0
    %v775 = vadd.f32 0.0, %v774
    %v776 = vpop.f32.mrf.mxu0
    %777 = vdwg.mxu0
    %v778 = vadd.f32 %v162, %v775
    %v779 = vsub.f32 0.0, %v778
    %v780 = vmul.f32 %v779, 1.442695
    %v781 = vpow.pop %v780
    %v782 = vadd.f32 %v781, 1.0
    %v783 = vrcp.pop %v782
    %v785 = vmul.f32 %v783, %v705
    %v787 = vsel %vm186, %v785, 0
    %789 = vmatprep.subr.mxu0 0.0
    %790 = vmatpush1.msra.mxu0 0.0
    %791 = vmatprep.subr.mxu0 0.0
    %792 = vmatpush1.msra.mxu0 0.0
    %793 = vmatprep.subr.mxu0 0.0
    %794 = vmatpush1.msra.mxu0 0.0
    %795 = vmatprep.subr.mxu0 0.0
    %796 = vmatpush1.msra.mxu0 0.0
    %797 = vmatprep.subr.mxu0 0.0
    %798 = vmatpush1.msra.mxu0 0.0
    %799 = vmatprep.subr.mxu0 0.0
    %800 = vmatpush1.msra.mxu0 0.0
    %801 = vmatprep.subr.mxu0 0.0
    %802 = vmatpush1.msra.mxu0 0.0
    %803 = vmatprep.subr.mxu0 0.0
    %804 = vmatpush1.msra.mxu0 0.0
    %805 = vmatprep.subr.mxu0 0.0
    %806 = vmatpush1.msra.mxu0 0.0
    %807 = vmatprep.subr.mxu0 0.0
    %808 = vmatpush1.msra.mxu0 0.0
    %809 = vmatprep.subr.mxu0 0.0
    %810 = vmatpush1.msra.mxu0 0.0
    %811 = vmatprep.subr.mxu0 0.0
    %812 = vmatpush1.msra.mxu0 0.0
    %813 = vmatprep.subr.mxu0 0.0
    %814 = vmatpush1.msra.mxu0 %v37
    %815 = vmatprep.subr.mxu0 0.0
    %816 = vmatpush1.msra.mxu0 %v36
    %817 = vmatprep.subr.mxu0 0.0
    %818 = vmatpush1.msra.mxu0 %v35
    %819 = vmatprep.subr.mxu0 0.0
    %820 = vmatpush1.msra.mxu0 %v34
    %821 = vmatprep.subr.mxu0 0.0
    %822 = vmatpush2.msra.mxu0 0.0
    %823 = vmatprep.subr.mxu0 0.0
    %824 = vmatpush2.msra.mxu0 0.0
    %825 = vmatprep.subr.mxu0 0.0
    %826 = vmatpush2.msra.mxu0 0.0
    %827 = vmatprep.subr.mxu0 0.0
    %828 = vmatpush2.msra.mxu0 0.0
    %829 = vmatprep.subr.mxu0 0.0
    %830 = vmatpush2.msra.mxu0 0.0
    %831 = vmatprep.subr.mxu0 0.0
    %832 = vmatpush2.msra.mxu0 0.0
    %833 = vmatprep.subr.mxu0 0.0
    %834 = vmatpush2.msra.mxu0 0.0
    %835 = vmatprep.subr.mxu0 0.0
    %836 = vmatpush2.msra.mxu0 0.0
    %837 = vmatprep.subr.mxu0 0.0
    %838 = vmatpush2.msra.mxu0 0.0
    %839 = vmatprep.subr.mxu0 0.0
    %840 = vmatpush2.msra.mxu0 0.0
    %841 = vmatprep.subr.mxu0 0.0
    %842 = vmatpush2.msra.mxu0 0.0
    %843 = vmatprep.subr.mxu0 0.0
    %844 = vmatpush2.msra.mxu0 0.0
    %845 = vmatprep.subr.mxu0 0.0
    %846 = vmatpush2.msra.mxu0 0.0
    %847 = vmatprep.subr.mxu0 0.0
    %848 = vmatpush2.msra.mxu0 0.0
    %849 = vmatprep.subr.mxu0 0.0
    %850 = vmatpush2.msra.mxu0 0.0
    %851 = vmatprep.subr.mxu0 0.0
    %852 = vmatpush2.msra.mxu0 0.0
    %853 = vmatprep.mubr.f32.mxu0 0.0
    %854 = vmatmul.mubr.f32.gmra.mxu0 %v787
    %v855 = vpop.f32.mrf.mxu0
    %v856 = vadd.f32 0.0, %v855
    %v857 = vpop.f32.mrf.mxu0
    %858 = vdwg.mxu0
    %860 = vrot.lane.b32.xlu0 %v856, 64
    %v861 = vpop.permute.xlu0 %860
    %v863 = vadd.f32 %v162, %v861
    %v864 = vtanh.pop %v863
    %v865 = vmul.f32 %v783, %v702
    %v866 = vsub.f32 1.0, %v783
    %868 = vrot.lane.b32.xlu0 %v864, 96
    %v869 = vpop.permute.xlu0 %868
    %v871 = vmul.f32 %v866, %v869
    %v872 = vadd.f32 %v865, %v871
    %v873 = vmax.f32 %v872, -5.0
    %v874 = vmin.f32 %v873, 5.0
    %876 = vrot.lane.b32.xlu0 %v874, 96
    %v877 = vpop.permute.xlu0 %876
    %v878 = vsel %vm186, %v877, 0
    %880 = vmatprep.subr.mxu0 0.0
    %881 = vmatpush1.msra.mxu0 0.0
    %882 = vmatprep.subr.mxu0 0.0
    %883 = vmatpush1.msra.mxu0 0.0
    %884 = vmatprep.subr.mxu0 0.0
    %885 = vmatpush1.msra.mxu0 0.0
    %886 = vmatprep.subr.mxu0 0.0
    %887 = vmatpush1.msra.mxu0 0.0
    %888 = vmatprep.subr.mxu0 0.0
    %889 = vmatpush1.msra.mxu0 0.0
    %890 = vmatprep.subr.mxu0 0.0
    %891 = vmatpush1.msra.mxu0 0.0
    %892 = vmatprep.subr.mxu0 0.0
    %893 = vmatpush1.msra.mxu0 0.0
    %894 = vmatprep.subr.mxu0 0.0
    %895 = vmatpush1.msra.mxu0 0.0
    %896 = vmatprep.subr.mxu0 0.0
    %897 = vmatpush1.msra.mxu0 0.0
    %898 = vmatprep.subr.mxu0 0.0
    %899 = vmatpush1.msra.mxu0 0.0
    %900 = vmatprep.subr.mxu0 0.0
    %901 = vmatpush1.msra.mxu0 0.0
    %902 = vmatprep.subr.mxu0 0.0
    %903 = vmatpush1.msra.mxu0 0.0
    %904 = vmatprep.subr.mxu0 0.0
    %905 = vmatpush1.msra.mxu0 %v33
    %906 = vmatprep.subr.mxu0 0.0
    %907 = vmatpush1.msra.mxu0 %v32
    %908 = vmatprep.subr.mxu0 0.0
    %909 = vmatpush1.msra.mxu0 %v31
    %910 = vmatprep.subr.mxu0 0.0
    %911 = vmatpush1.msra.mxu0 %v30
    %912 = vmatprep.subr.mxu0 0.0
    %913 = vmatpush2.msra.mxu0 0.0
    %914 = vmatprep.subr.mxu0 0.0
    %915 = vmatpush2.msra.mxu0 0.0
    %916 = vmatprep.subr.mxu0 0.0
    %917 = vmatpush2.msra.mxu0 0.0
    %918 = vmatprep.subr.mxu0 0.0
    %919 = vmatpush2.msra.mxu0 0.0
    %920 = vmatprep.subr.mxu0 0.0
    %921 = vmatpush2.msra.mxu0 0.0
    %922 = vmatprep.subr.mxu0 0.0
    %923 = vmatpush2.msra.mxu0 0.0
    %924 = vmatprep.subr.mxu0 0.0
    %925 = vmatpush2.msra.mxu0 0.0
    %926 = vmatprep.subr.mxu0 0.0
    %927 = vmatpush2.msra.mxu0 0.0
    %928 = vmatprep.subr.mxu0 0.0
    %929 = vmatpush2.msra.mxu0 0.0
    %930 = vmatprep.subr.mxu0 0.0
    %931 = vmatpush2.msra.mxu0 0.0
    %932 = vmatprep.subr.mxu0 0.0
    %933 = vmatpush2.msra.mxu0 0.0
    %934 = vmatprep.subr.mxu0 0.0
    %935 = vmatpush2.msra.mxu0 0.0
    %936 = vmatprep.subr.mxu0 0.0
    %937 = vmatpush2.msra.mxu0 0.0
    %938 = vmatprep.subr.mxu0 0.0
    %939 = vmatpush2.msra.mxu0 0.0
    %940 = vmatprep.subr.mxu0 0.0
    %941 = vmatpush2.msra.mxu0 0.0
    %942 = vmatprep.subr.mxu0 0.0
    %943 = vmatpush2.msra.mxu0 0.0
    %944 = vmatprep.mubr.f32.mxu0 0.0
    %945 = vmatmul.mubr.f32.gmra.mxu0 %v878
    %v946 = vpop.f32.mrf.mxu0
    %v947 = vadd.f32 0.0, %v946
    %v948 = vpop.f32.mrf.mxu0
    %949 = vdwg.mxu0
    %v950 = vadd.f32 %v167, %v947
    %v951 = vsub.f32 0.0, %v950
    %v952 = vmul.f32 %v951, 1.442695
    %v953 = vpow.pop %v952
    %v954 = vadd.f32 %v953, 1.0
    %v955 = vrcp.pop %v954
    %v957 = vmul.f32 %v955, %v877
    %v959 = vsel %vm186, %v957, 0
    %961 = vmatprep.subr.mxu0 0.0
    %962 = vmatpush1.msra.mxu0 0.0
    %963 = vmatprep.subr.mxu0 0.0
    %964 = vmatpush1.msra.mxu0 0.0
    %965 = vmatprep.subr.mxu0 0.0
    %966 = vmatpush1.msra.mxu0 0.0
    %967 = vmatprep.subr.mxu0 0.0
    %968 = vmatpush1.msra.mxu0 0.0
    %969 = vmatprep.subr.mxu0 0.0
    %970 = vmatpush1.msra.mxu0 0.0
    %971 = vmatprep.subr.mxu0 0.0
    %972 = vmatpush1.msra.mxu0 0.0
    %973 = vmatprep.subr.mxu0 0.0
    %974 = vmatpush1.msra.mxu0 0.0
    %975 = vmatprep.subr.mxu0 0.0
    %976 = vmatpush1.msra.mxu0 0.0
    %977 = vmatprep.subr.mxu0 0.0
    %978 = vmatpush1.msra.mxu0 0.0
    %979 = vmatprep.subr.mxu0 0.0
    %980 = vmatpush1.msra.mxu0 0.0
    %981 = vmatprep.subr.mxu0 0.0
    %982 = vmatpush1.msra.mxu0 0.0
    %983 = vmatprep.subr.mxu0 0.0
    %984 = vmatpush1.msra.mxu0 0.0
    %985 = vmatprep.subr.mxu0 0.0
    %986 = vmatpush1.msra.mxu0 %v37
    %987 = vmatprep.subr.mxu0 0.0
    %988 = vmatpush1.msra.mxu0 %v36
    %989 = vmatprep.subr.mxu0 0.0
    %990 = vmatpush1.msra.mxu0 %v35
    %991 = vmatprep.subr.mxu0 0.0
    %992 = vmatpush1.msra.mxu0 %v34
    %993 = vmatprep.subr.mxu0 0.0
    %994 = vmatpush2.msra.mxu0 0.0
    %995 = vmatprep.subr.mxu0 0.0
    %996 = vmatpush2.msra.mxu0 0.0
    %997 = vmatprep.subr.mxu0 0.0
    %998 = vmatpush2.msra.mxu0 0.0
    %999 = vmatprep.subr.mxu0 0.0
    %1000 = vmatpush2.msra.mxu0 0.0
    %1001 = vmatprep.subr.mxu0 0.0
    %1002 = vmatpush2.msra.mxu0 0.0
    %1003 = vmatprep.subr.mxu0 0.0
    %1004 = vmatpush2.msra.mxu0 0.0
    %1005 = vmatprep.subr.mxu0 0.0
    %1006 = vmatpush2.msra.mxu0 0.0
    %1007 = vmatprep.subr.mxu0 0.0
    %1008 = vmatpush2.msra.mxu0 0.0
    %1009 = vmatprep.subr.mxu0 0.0
    %1010 = vmatpush2.msra.mxu0 0.0
    %1011 = vmatprep.subr.mxu0 0.0
    %1012 = vmatpush2.msra.mxu0 0.0
    %1013 = vmatprep.subr.mxu0 0.0
    %1014 = vmatpush2.msra.mxu0 0.0
    %1015 = vmatprep.subr.mxu0 0.0
    %1016 = vmatpush2.msra.mxu0 0.0
    %1017 = vmatprep.subr.mxu0 0.0
    %1018 = vmatpush2.msra.mxu0 0.0
    %1019 = vmatprep.subr.mxu0 0.0
    %1020 = vmatpush2.msra.mxu0 0.0
    %1021 = vmatprep.subr.mxu0 0.0
    %1022 = vmatpush2.msra.mxu0 0.0
    %1023 = vmatprep.subr.mxu0 0.0
    %1024 = vmatpush2.msra.mxu0 0.0
    %1025 = vmatprep.mubr.f32.mxu0 0.0
    %1026 = vmatmul.mubr.f32.gmra.mxu0 %v959
    %v1027 = vpop.f32.mrf.mxu0
    %v1028 = vadd.f32 0.0, %v1027
    %v1029 = vpop.f32.mrf.mxu0
    %1030 = vdwg.mxu0
    %1032 = vrot.lane.b32.xlu0 %v1028, 64
    %v1033 = vpop.permute.xlu0 %1032
    %v1035 = vadd.f32 %v167, %v1033
    %v1036 = vtanh.pop %v1035
    %v1037 = vmul.f32 %v955, %v874
    %v1038 = vsub.f32 1.0, %v955
    %1040 = vrot.lane.b32.xlu0 %v1036, 96
    %v1041 = vpop.permute.xlu0 %1040
    %v1043 = vmul.f32 %v1038, %v1041
    %v1044 = vadd.f32 %v1037, %v1043
    %v1045 = vmax.f32 %v1044, -5.0
    %v1046 = vmin.f32 %v1045, 5.0
    %1048 = vrot.lane.b32.xlu0 %v1046, 96
    %v1049 = vpop.permute.xlu0 %1048
    %v1050 = vsel %vm186, %v1049, 0
    %1052 = vmatprep.subr.mxu0 0.0
    %1053 = vmatpush1.msra.mxu0 0.0
    %1054 = vmatprep.subr.mxu0 0.0
    %1055 = vmatpush1.msra.mxu0 0.0
    %1056 = vmatprep.subr.mxu0 0.0
    %1057 = vmatpush1.msra.mxu0 0.0
    %1058 = vmatprep.subr.mxu0 0.0
    %1059 = vmatpush1.msra.mxu0 0.0
    %1060 = vmatprep.subr.mxu0 0.0
    %1061 = vmatpush1.msra.mxu0 0.0
    %1062 = vmatprep.subr.mxu0 0.0
    %1063 = vmatpush1.msra.mxu0 0.0
    %1064 = vmatprep.subr.mxu0 0.0
    %1065 = vmatpush1.msra.mxu0 0.0
    %1066 = vmatprep.subr.mxu0 0.0
    %1067 = vmatpush1.msra.mxu0 0.0
    %1068 = vmatprep.subr.mxu0 0.0
    %1069 = vmatpush1.msra.mxu0 0.0
    %1070 = vmatprep.subr.mxu0 0.0
    %1071 = vmatpush1.msra.mxu0 0.0
    %1072 = vmatprep.subr.mxu0 0.0
    %1073 = vmatpush1.msra.mxu0 0.0
    %1074 = vmatprep.subr.mxu0 0.0
    %1075 = vmatpush1.msra.mxu0 0.0
    %1076 = vmatprep.subr.mxu0 0.0
    %1077 = vmatpush1.msra.mxu0 %v33
    %1078 = vmatprep.subr.mxu0 0.0
    %1079 = vmatpush1.msra.mxu0 %v32
    %1080 = vmatprep.subr.mxu0 0.0
    %1081 = vmatpush1.msra.mxu0 %v31
    %1082 = vmatprep.subr.mxu0 0.0
    %1083 = vmatpush1.msra.mxu0 %v30
    %1084 = vmatprep.subr.mxu0 0.0
    %1085 = vmatpush2.msra.mxu0 0.0
    %1086 = vmatprep.subr.mxu0 0.0
    %1087 = vmatpush2.msra.mxu0 0.0
    %1088 = vmatprep.subr.mxu0 0.0
    %1089 = vmatpush2.msra.mxu0 0.0
    %1090 = vmatprep.subr.mxu0 0.0
    %1091 = vmatpush2.msra.mxu0 0.0
    %1092 = vmatprep.subr.mxu0 0.0
    %1093 = vmatpush2.msra.mxu0 0.0
    %1094 = vmatprep.subr.mxu0 0.0
    %1095 = vmatpush2.msra.mxu0 0.0
    %1096 = vmatprep.subr.mxu0 0.0
    %1097 = vmatpush2.msra.mxu0 0.0
    %1098 = vmatprep.subr.mxu0 0.0
    %1099 = vmatpush2.msra.mxu0 0.0
    %1100 = vmatprep.subr.mxu0 0.0
    %1101 = vmatpush2.msra.mxu0 0.0
    %1102 = vmatprep.subr.mxu0 0.0
    %1103 = vmatpush2.msra.mxu0 0.0
    %1104 = vmatprep.subr.mxu0 0.0
    %1105 = vmatpush2.msra.mxu0 0.0
    %1106 = vmatprep.subr.mxu0 0.0
    %1107 = vmatpush2.msra.mxu0 0.0
    %1108 = vmatprep.subr.mxu0 0.0
    %1109 = vmatpush2.msra.mxu0 0.0
    %1110 = vmatprep.subr.mxu0 0.0
    %1111 = vmatpush2.msra.mxu0 0.0
    %1112 = vmatprep.subr.mxu0 0.0
    %1113 = vmatpush2.msra.mxu0 0.0
    %1114 = vmatprep.subr.mxu0 0.0
    %1115 = vmatpush2.msra.mxu0 0.0
    %1116 = vmatprep.mubr.f32.mxu0 0.0
    %1117 = vmatmul.mubr.f32.gmra.mxu0 %v1050
    %v1118 = vpop.f32.mrf.mxu0
    %v1119 = vadd.f32 0.0, %v1118
    %v1120 = vpop.f32.mrf.mxu0
    %1121 = vdwg.mxu0
    %v1122 = vadd.f32 %v172, %v1119
    %v1123 = vsub.f32 0.0, %v1122
    %v1124 = vmul.f32 %v1123, 1.442695
    %v1125 = vpow.pop %v1124
    %v1126 = vadd.f32 %v1125, 1.0
    %v1127 = vrcp.pop %v1126
    %v1129 = vmul.f32 %v1127, %v1049
    %v1131 = vsel %vm186, %v1129, 0
    %1133 = vmatprep.subr.mxu0 0.0
    %1134 = vmatpush1.msra.mxu0 0.0
    %1135 = vmatprep.subr.mxu0 0.0
    %1136 = vmatpush1.msra.mxu0 0.0
    %1137 = vmatprep.subr.mxu0 0.0
    %1138 = vmatpush1.msra.mxu0 0.0
    %1139 = vmatprep.subr.mxu0 0.0
    %1140 = vmatpush1.msra.mxu0 0.0
    %1141 = vmatprep.subr.mxu0 0.0
    %1142 = vmatpush1.msra.mxu0 0.0
    %1143 = vmatprep.subr.mxu0 0.0
    %1144 = vmatpush1.msra.mxu0 0.0
    %1145 = vmatprep.subr.mxu0 0.0
    %1146 = vmatpush1.msra.mxu0 0.0
    %1147 = vmatprep.subr.mxu0 0.0
    %1148 = vmatpush1.msra.mxu0 0.0
    %1149 = vmatprep.subr.mxu0 0.0
    %1150 = vmatpush1.msra.mxu0 0.0
    %1151 = vmatprep.subr.mxu0 0.0
    %1152 = vmatpush1.msra.mxu0 0.0
    %1153 = vmatprep.subr.mxu0 0.0
    %1154 = vmatpush1.msra.mxu0 0.0
    %1155 = vmatprep.subr.mxu0 0.0
    %1156 = vmatpush1.msra.mxu0 0.0
    %1157 = vmatprep.subr.mxu0 0.0
    %1158 = vmatpush1.msra.mxu0 %v37
    %1159 = vmatprep.subr.mxu0 0.0
    %1160 = vmatpush1.msra.mxu0 %v36
    %1161 = vmatprep.subr.mxu0 0.0
    %1162 = vmatpush1.msra.mxu0 %v35
    %1163 = vmatprep.subr.mxu0 0.0
    %1164 = vmatpush1.msra.mxu0 %v34
    %1165 = vmatprep.subr.mxu0 0.0
    %1166 = vmatpush2.msra.mxu0 0.0
    %1167 = vmatprep.subr.mxu0 0.0
    %1168 = vmatpush2.msra.mxu0 0.0
    %1169 = vmatprep.subr.mxu0 0.0
    %1170 = vmatpush2.msra.mxu0 0.0
    %1171 = vmatprep.subr.mxu0 0.0
    %1172 = vmatpush2.msra.mxu0 0.0
    %1173 = vmatprep.subr.mxu0 0.0
    %1174 = vmatpush2.msra.mxu0 0.0
    %1175 = vmatprep.subr.mxu0 0.0
    %1176 = vmatpush2.msra.mxu0 0.0
    %1177 = vmatprep.subr.mxu0 0.0
    %1178 = vmatpush2.msra.mxu0 0.0
    %1179 = vmatprep.subr.mxu0 0.0
    %1180 = vmatpush2.msra.mxu0 0.0
    %1181 = vmatprep.subr.mxu0 0.0
    %1182 = vmatpush2.msra.mxu0 0.0
    %1183 = vmatprep.subr.mxu0 0.0
    %1184 = vmatpush2.msra.mxu0 0.0
    %1185 = vmatprep.subr.mxu0 0.0
    %1186 = vmatpush2.msra.mxu0 0.0
    %1187 = vmatprep.subr.mxu0 0.0
    %1188 = vmatpush2.msra.mxu0 0.0
    %1189 = vmatprep.subr.mxu0 0.0
    %1190 = vmatpush2.msra.mxu0 0.0
    %1191 = vmatprep.subr.mxu0 0.0
    %1192 = vmatpush2.msra.mxu0 0.0
    %1193 = vmatprep.subr.mxu0 0.0
    %1194 = vmatpush2.msra.mxu0 0.0
    %1195 = vmatprep.subr.mxu0 0.0
    %1196 = vmatpush2.msra.mxu0 0.0
    %1197 = vmatprep.mubr.f32.mxu0 0.0
    %1198 = vmatmul.mubr.f32.gmra.mxu0 %v1131
    %v1199 = vpop.f32.mrf.mxu0
    %v1200 = vadd.f32 0.0, %v1199
    %v1201 = vpop.f32.mrf.mxu0
    %1202 = vdwg.mxu0
    %1204 = vrot.lane.b32.xlu0 %v1200, 64
    %v1205 = vpop.permute.xlu0 %1204
    %v1207 = vadd.f32 %v172, %v1205
    %v1208 = vtanh.pop %v1207
    %v1209 = vmul.f32 %v1127, %v1046
    %v1210 = vsub.f32 1.0, %v1127
    %1212 = vrot.lane.b32.xlu0 %v1208, 96
    %v1213 = vpop.permute.xlu0 %1212
    %v1215 = vmul.f32 %v1210, %v1213
    %v1216 = vadd.f32 %v1209, %v1215
    %v1217 = vmax.f32 %v1216, -5.0
    %v1218 = vmin.f32 %v1217, 5.0
    %1220 = vrot.lane.b32.xlu0 %v1218, 96
    %v1221 = vpop.permute.xlu0 %1220
    %v1222 = vsel %vm186, %v1221, 0
    %1224 = vmatprep.subr.mxu0 0.0
    %1225 = vmatpush1.msra.mxu0 0.0
    %1226 = vmatprep.subr.mxu0 0.0
    %1227 = vmatpush1.msra.mxu0 0.0
    %1228 = vmatprep.subr.mxu0 0.0
    %1229 = vmatpush1.msra.mxu0 0.0
    %1230 = vmatprep.subr.mxu0 0.0
    %1231 = vmatpush1.msra.mxu0 0.0
    %1232 = vmatprep.subr.mxu0 0.0
    %1233 = vmatpush1.msra.mxu0 0.0
    %1234 = vmatprep.subr.mxu0 0.0
    %1235 = vmatpush1.msra.mxu0 0.0
    %1236 = vmatprep.subr.mxu0 0.0
    %1237 = vmatpush1.msra.mxu0 0.0
    %1238 = vmatprep.subr.mxu0 0.0
    %1239 = vmatpush1.msra.mxu0 0.0
    %1240 = vmatprep.subr.mxu0 0.0
    %1241 = vmatpush1.msra.mxu0 0.0
    %1242 = vmatprep.subr.mxu0 0.0
    %1243 = vmatpush1.msra.mxu0 0.0
    %1244 = vmatprep.subr.mxu0 0.0
    %1245 = vmatpush1.msra.mxu0 0.0
    %1246 = vmatprep.subr.mxu0 0.0
    %1247 = vmatpush1.msra.mxu0 0.0
    %1248 = vmatprep.subr.mxu0 0.0
    %1249 = vmatpush1.msra.mxu0 %v33
    %1250 = vmatprep.subr.mxu0 0.0
    %1251 = vmatpush1.msra.mxu0 %v32
    %1252 = vmatprep.subr.mxu0 0.0
    %1253 = vmatpush1.msra.mxu0 %v31
    %1254 = vmatprep.subr.mxu0 0.0
    %1255 = vmatpush1.msra.mxu0 %v30
    %1256 = vmatprep.subr.mxu0 0.0
    %1257 = vmatpush2.msra.mxu0 0.0
    %1258 = vmatprep.subr.mxu0 0.0
    %1259 = vmatpush2.msra.mxu0 0.0
    %1260 = vmatprep.subr.mxu0 0.0
    %1261 = vmatpush2.msra.mxu0 0.0
    %1262 = vmatprep.subr.mxu0 0.0
    %1263 = vmatpush2.msra.mxu0 0.0
    %1264 = vmatprep.subr.mxu0 0.0
    %1265 = vmatpush2.msra.mxu0 0.0
    %1266 = vmatprep.subr.mxu0 0.0
    %1267 = vmatpush2.msra.mxu0 0.0
    %1268 = vmatprep.subr.mxu0 0.0
    %1269 = vmatpush2.msra.mxu0 0.0
    %1270 = vmatprep.subr.mxu0 0.0
    %1271 = vmatpush2.msra.mxu0 0.0
    %1272 = vmatprep.subr.mxu0 0.0
    %1273 = vmatpush2.msra.mxu0 0.0
    %1274 = vmatprep.subr.mxu0 0.0
    %1275 = vmatpush2.msra.mxu0 0.0
    %1276 = vmatprep.subr.mxu0 0.0
    %1277 = vmatpush2.msra.mxu0 0.0
    %1278 = vmatprep.subr.mxu0 0.0
    %1279 = vmatpush2.msra.mxu0 0.0
    %1280 = vmatprep.subr.mxu0 0.0
    %1281 = vmatpush2.msra.mxu0 0.0
    %1282 = vmatprep.subr.mxu0 0.0
    %1283 = vmatpush2.msra.mxu0 0.0
    %1284 = vmatprep.subr.mxu0 0.0
    %1285 = vmatpush2.msra.mxu0 0.0
    %1286 = vmatprep.subr.mxu0 0.0
    %1287 = vmatpush2.msra.mxu0 0.0
    %1288 = vmatprep.mubr.f32.mxu0 0.0
    %1289 = vmatmul.mubr.f32.gmra.mxu0 %v1222
    %v1290 = vpop.f32.mrf.mxu0
    %v1291 = vadd.f32 0.0, %v1290
    %v1292 = vpop.f32.mrf.mxu0
    %1293 = vdwg.mxu0
    %v1294 = vadd.f32 %v177, %v1291
    %v1295 = vsub.f32 0.0, %v1294
    %v1296 = vmul.f32 %v1295, 1.442695
    %v1297 = vpow.pop %v1296
    %v1298 = vadd.f32 %v1297, 1.0
    %v1299 = vrcp.pop %v1298
    %v1301 = vmul.f32 %v1299, %v1221
    %v1303 = vsel %vm186, %v1301, 0
    %1305 = vmatprep.subr.mxu0 0.0
    %1306 = vmatpush1.msra.mxu0 0.0
    %1307 = vmatprep.subr.mxu0 0.0
    %1308 = vmatpush1.msra.mxu0 0.0
    %1309 = vmatprep.subr.mxu0 0.0
    %1310 = vmatpush1.msra.mxu0 0.0
    %1311 = vmatprep.subr.mxu0 0.0
    %1312 = vmatpush1.msra.mxu0 0.0
    %1313 = vmatprep.subr.mxu0 0.0
    %1314 = vmatpush1.msra.mxu0 0.0
    %1315 = vmatprep.subr.mxu0 0.0
    %1316 = vmatpush1.msra.mxu0 0.0
    %1317 = vmatprep.subr.mxu0 0.0
    %1318 = vmatpush1.msra.mxu0 0.0
    %1319 = vmatprep.subr.mxu0 0.0
    %1320 = vmatpush1.msra.mxu0 0.0
    %1321 = vmatprep.subr.mxu0 0.0
    %1322 = vmatpush1.msra.mxu0 0.0
    %1323 = vmatprep.subr.mxu0 0.0
    %1324 = vmatpush1.msra.mxu0 0.0
    %1325 = vmatprep.subr.mxu0 0.0
    %1326 = vmatpush1.msra.mxu0 0.0
    %1327 = vmatprep.subr.mxu0 0.0
    %1328 = vmatpush1.msra.mxu0 0.0
    %1329 = vmatprep.subr.mxu0 0.0
    %1330 = vmatpush1.msra.mxu0 %v37
    %1331 = vmatprep.subr.mxu0 0.0
    %1332 = vmatpush1.msra.mxu0 %v36
    %1333 = vmatprep.subr.mxu0 0.0
    %1334 = vmatpush1.msra.mxu0 %v35
    %1335 = vmatprep.subr.mxu0 0.0
    %1336 = vmatpush1.msra.mxu0 %v34
    %1337 = vmatprep.subr.mxu0 0.0
    %1338 = vmatpush2.msra.mxu0 0.0
    %1339 = vmatprep.subr.mxu0 0.0
    %1340 = vmatpush2.msra.mxu0 0.0
    %1341 = vmatprep.subr.mxu0 0.0
    %1342 = vmatpush2.msra.mxu0 0.0
    %1343 = vmatprep.subr.mxu0 0.0
    %1344 = vmatpush2.msra.mxu0 0.0
    %1345 = vmatprep.subr.mxu0 0.0
    %1346 = vmatpush2.msra.mxu0 0.0
    %1347 = vmatprep.subr.mxu0 0.0
    %1348 = vmatpush2.msra.mxu0 0.0
    %1349 = vmatprep.subr.mxu0 0.0
    %1350 = vmatpush2.msra.mxu0 0.0
    %1351 = vmatprep.subr.mxu0 0.0
    %1352 = vmatpush2.msra.mxu0 0.0
    %1353 = vmatprep.subr.mxu0 0.0
    %1354 = vmatpush2.msra.mxu0 0.0
    %1355 = vmatprep.subr.mxu0 0.0
    %1356 = vmatpush2.msra.mxu0 0.0
    %1357 = vmatprep.subr.mxu0 0.0
    %1358 = vmatpush2.msra.mxu0 0.0
    %1359 = vmatprep.subr.mxu0 0.0
    %1360 = vmatpush2.msra.mxu0 0.0
    %1361 = vmatprep.subr.mxu0 0.0
    %1362 = vmatpush2.msra.mxu0 0.0
    %1363 = vmatprep.subr.mxu0 0.0
    %1364 = vmatpush2.msra.mxu0 0.0
    %1365 = vmatprep.subr.mxu0 0.0
    %1366 = vmatpush2.msra.mxu0 0.0
    %1367 = vmatprep.subr.mxu0 0.0
    %1368 = vmatpush2.msra.mxu0 0.0
    %1369 = vmatprep.mubr.f32.mxu0 0.0
    %1370 = vmatmul.mubr.f32.gmra.mxu0 %v1303
    %v1371 = vpop.f32.mrf.mxu0
    %v1372 = vadd.f32 0.0, %v1371
    %v1373 = vpop.f32.mrf.mxu0
    %1374 = vdwg.mxu0
    %1376 = vrot.lane.b32.xlu0 %v1372, 64
    %v1377 = vpop.permute.xlu0 %1376
    %v1379 = vadd.f32 %v177, %v1377
    %v1380 = vtanh.pop %v1379
    %v1381 = vmul.f32 %v1299, %v1218
    %v1382 = vsub.f32 1.0, %v1299
    %1384 = vrot.lane.b32.xlu0 %v1380, 96
    %v1385 = vpop.permute.xlu0 %1384
    %v1387 = vmul.f32 %v1382, %v1385
    %v1388 = vadd.f32 %v1381, %v1387
    %v1389 = vmax.f32 %v1388, -5.0
    %v1390 = vmin.f32 %v1389, 5.0
    %1392 = vrot.lane.b32.xlu0 %v1390, 96
    %v1393 = vpop.permute.xlu0 %1392
    %v1394 = vsel %vm186, %v1393, 0
    %1396 = vmatprep.subr.mxu0 0.0
    %1397 = vmatpush1.msra.mxu0 0.0
    %1398 = vmatprep.subr.mxu0 0.0
    %1399 = vmatpush1.msra.mxu0 0.0
    %1400 = vmatprep.subr.mxu0 0.0
    %1401 = vmatpush1.msra.mxu0 0.0
    %1402 = vmatprep.subr.mxu0 0.0
    %1403 = vmatpush1.msra.mxu0 0.0
    %1404 = vmatprep.subr.mxu0 0.0
    %1405 = vmatpush1.msra.mxu0 0.0
    %1406 = vmatprep.subr.mxu0 0.0
    %1407 = vmatpush1.msra.mxu0 0.0
    %1408 = vmatprep.subr.mxu0 0.0
    %1409 = vmatpush1.msra.mxu0 0.0
    %1410 = vmatprep.subr.mxu0 0.0
    %1411 = vmatpush1.msra.mxu0 0.0
    %1412 = vmatprep.subr.mxu0 0.0
    %1413 = vmatpush1.msra.mxu0 0.0
    %1414 = vmatprep.subr.mxu0 0.0
    %1415 = vmatpush1.msra.mxu0 0.0
    %1416 = vmatprep.subr.mxu0 0.0
    %1417 = vmatpush1.msra.mxu0 0.0
    %1418 = vmatprep.subr.mxu0 0.0
    %1419 = vmatpush1.msra.mxu0 0.0
    %1420 = vmatprep.subr.mxu0 0.0
    %1421 = vmatpush1.msra.mxu0 %v33
    %1422 = vmatprep.subr.mxu0 0.0
    %1423 = vmatpush1.msra.mxu0 %v32
    %1424 = vmatprep.subr.mxu0 0.0
    %1425 = vmatpush1.msra.mxu0 %v31
    %1426 = vmatprep.subr.mxu0 0.0
    %1427 = vmatpush1.msra.mxu0 %v30
    %1428 = vmatprep.subr.mxu0 0.0
    %1429 = vmatpush2.msra.mxu0 0.0
    %1430 = vmatprep.subr.mxu0 0.0
    %1431 = vmatpush2.msra.mxu0 0.0
    %1432 = vmatprep.subr.mxu0 0.0
    %1433 = vmatpush2.msra.mxu0 0.0
    %1434 = vmatprep.subr.mxu0 0.0
    %1435 = vmatpush2.msra.mxu0 0.0
    %1436 = vmatprep.subr.mxu0 0.0
    %1437 = vmatpush2.msra.mxu0 0.0
    %1438 = vmatprep.subr.mxu0 0.0
    %1439 = vmatpush2.msra.mxu0 0.0
    %1440 = vmatprep.subr.mxu0 0.0
    %1441 = vmatpush2.msra.mxu0 0.0
    %1442 = vmatprep.subr.mxu0 0.0
    %1443 = vmatpush2.msra.mxu0 0.0
    %1444 = vmatprep.subr.mxu0 0.0
    %1445 = vmatpush2.msra.mxu0 0.0
    %1446 = vmatprep.subr.mxu0 0.0
    %1447 = vmatpush2.msra.mxu0 0.0
    %1448 = vmatprep.subr.mxu0 0.0
    %1449 = vmatpush2.msra.mxu0 0.0
    %1450 = vmatprep.subr.mxu0 0.0
    %1451 = vmatpush2.msra.mxu0 0.0
    %1452 = vmatprep.subr.mxu0 0.0
    %1453 = vmatpush2.msra.mxu0 0.0
    %1454 = vmatprep.subr.mxu0 0.0
    %1455 = vmatpush2.msra.mxu0 0.0
    %1456 = vmatprep.subr.mxu0 0.0
    %1457 = vmatpush2.msra.mxu0 0.0
    %1458 = vmatprep.subr.mxu0 0.0
    %1459 = vmatpush2.msra.mxu0 0.0
    %1460 = vmatprep.mubr.f32.mxu0 0.0
    %1461 = vmatmul.mubr.f32.gmra.mxu0 %v1394
    %v1462 = vpop.f32.mrf.mxu0
    %v1463 = vadd.f32 0.0, %v1462
    %v1464 = vpop.f32.mrf.mxu0
    %1465 = vdwg.mxu0
    %v1466 = vadd.f32 %v182, %v1463
    %v1467 = vsub.f32 0.0, %v1466
    %v1468 = vmul.f32 %v1467, 1.442695
    %v1469 = vpow.pop %v1468
    %v1470 = vadd.f32 %v1469, 1.0
    %v1471 = vrcp.pop %v1470
    %v1473 = vmul.f32 %v1471, %v1393
    %v1475 = vsel %vm186, %v1473, 0
    %1477 = vmatprep.subr.mxu0 0.0
    %1478 = vmatpush1.msra.mxu0 0.0
    %1479 = vmatprep.subr.mxu0 0.0
    %1480 = vmatpush1.msra.mxu0 0.0
    %1481 = vmatprep.subr.mxu0 0.0
    %1482 = vmatpush1.msra.mxu0 0.0
    %1483 = vmatprep.subr.mxu0 0.0
    %1484 = vmatpush1.msra.mxu0 0.0
    %1485 = vmatprep.subr.mxu0 0.0
    %1486 = vmatpush1.msra.mxu0 0.0
    %1487 = vmatprep.subr.mxu0 0.0
    %1488 = vmatpush1.msra.mxu0 0.0
    %1489 = vmatprep.subr.mxu0 0.0
    %1490 = vmatpush1.msra.mxu0 0.0
    %1491 = vmatprep.subr.mxu0 0.0
    %1492 = vmatpush1.msra.mxu0 0.0
    %1493 = vmatprep.subr.mxu0 0.0
    %1494 = vmatpush1.msra.mxu0 0.0
    %1495 = vmatprep.subr.mxu0 0.0
    %1496 = vmatpush1.msra.mxu0 0.0
    %1497 = vmatprep.subr.mxu0 0.0
    %1498 = vmatpush1.msra.mxu0 0.0
    %1499 = vmatprep.subr.mxu0 0.0
    %1500 = vmatpush1.msra.mxu0 0.0
    %1501 = vmatprep.subr.mxu0 0.0
    %1502 = vmatpush1.msra.mxu0 %v37
    %1503 = vmatprep.subr.mxu0 0.0
    %1504 = vmatpush1.msra.mxu0 %v36
    %1505 = vmatprep.subr.mxu0 0.0
    %1506 = vmatpush1.msra.mxu0 %v35
    %1507 = vmatprep.subr.mxu0 0.0
    %1508 = vmatpush1.msra.mxu0 %v34
    %1509 = vmatprep.subr.mxu0 0.0
    %1510 = vmatpush2.msra.mxu0 0.0
    %1511 = vmatprep.subr.mxu0 0.0
    %1512 = vmatpush2.msra.mxu0 0.0
    %1513 = vmatprep.subr.mxu0 0.0
    %1514 = vmatpush2.msra.mxu0 0.0
    %1515 = vmatprep.subr.mxu0 0.0
    %1516 = vmatpush2.msra.mxu0 0.0
    %1517 = vmatprep.subr.mxu0 0.0
    %1518 = vmatpush2.msra.mxu0 0.0
    %1519 = vmatprep.subr.mxu0 0.0
    %1520 = vmatpush2.msra.mxu0 0.0
    %1521 = vmatprep.subr.mxu0 0.0
    %1522 = vmatpush2.msra.mxu0 0.0
    %1523 = vmatprep.subr.mxu0 0.0
    %1524 = vmatpush2.msra.mxu0 0.0
    %1525 = vmatprep.subr.mxu0 0.0
    %1526 = vmatpush2.msra.mxu0 0.0
    %1527 = vmatprep.subr.mxu0 0.0
    %1528 = vmatpush2.msra.mxu0 0.0
    %1529 = vmatprep.subr.mxu0 0.0
    %1530 = vmatpush2.msra.mxu0 0.0
    %1531 = vmatprep.subr.mxu0 0.0
    %1532 = vmatpush2.msra.mxu0 0.0
    %1533 = vmatprep.subr.mxu0 0.0
    %1534 = vmatpush2.msra.mxu0 0.0
    %1535 = vmatprep.subr.mxu0 0.0
    %1536 = vmatpush2.msra.mxu0 0.0
    %1537 = vmatprep.subr.mxu0 0.0
    %1538 = vmatpush2.msra.mxu0 0.0
    %1539 = vmatprep.subr.mxu0 0.0
    %1540 = vmatpush2.msra.mxu0 0.0
    %1541 = vmatprep.mubr.f32.mxu0 0.0
    %1542 = vmatmul.mubr.f32.gmra.mxu0 %v1475
    %v1543 = vpop.f32.mrf.mxu0
    %v1544 = vadd.f32 0.0, %v1543
    %v1545 = vpop.f32.mrf.mxu0
    %1546 = vdwg.mxu0
    %1548 = vrot.lane.b32.xlu0 %v1544, 64
    %v1549 = vpop.permute.xlu0 %1548
    %v1551 = vadd.f32 %v182, %v1549
    %v1552 = vtanh.pop %v1551
    %v1553 = vmul.f32 %v1471, %v1390
    %v1554 = vsub.f32 1.0, %v1471
    %1556 = vrot.lane.b32.xlu0 %v1552, 96
    %v1557 = vpop.permute.xlu0 %1556
    %v1559 = vmul.f32 %v1554, %v1557
    %v1560 = vadd.f32 %v1553, %v1559
    %v1561 = vmax.f32 %v1560, -5.0
    %v1562 = vmin.f32 %v1561, 5.0
    %v1563 = vld [vmem:[%s6] sm:$0xff]
    %v1564 = vld [vmem:[%s6 + $0x8] sm:$0xff]
    %v1565 = vld [vmem:[%s6 + $0x10] sm:$0xff]
    %v1566 = vld [vmem:[%s6 + $0x18] sm:$0xff]
    %v1567 = vld [vmem:[%s7] sm:$0x1]
    %v1569 = vlaneseq
    %v1570 = vshrl.u32 %v1569, 7
    %v1571 = vsub.s32 0, %v1570
    %v1572 = vrot.slane %v1567, %v1571
    %1575 = vrot.lane.b32.xlu0 %v1562, 96
    %v1576 = vpop.permute.xlu0 %1575
    %v1577 = vsel %vm186, %v1576, 0
    %1579 = vmatprep.subr.mxu0 0.0
    %1580 = vmatpush1.msra.mxu0 0.0
    %1581 = vmatprep.subr.mxu0 0.0
    %1582 = vmatpush1.msra.mxu0 0.0
    %1583 = vmatprep.subr.mxu0 0.0
    %1584 = vmatpush1.msra.mxu0 0.0
    %1585 = vmatprep.subr.mxu0 0.0
    %1586 = vmatpush1.msra.mxu0 0.0
    %1587 = vmatprep.subr.mxu0 0.0
    %1588 = vmatpush1.msra.mxu0 0.0
    %1589 = vmatprep.subr.mxu0 0.0
    %1590 = vmatpush1.msra.mxu0 0.0
    %1591 = vmatprep.subr.mxu0 0.0
    %1592 = vmatpush1.msra.mxu0 0.0
    %1593 = vmatprep.subr.mxu0 0.0
    %1594 = vmatpush1.msra.mxu0 0.0
    %1595 = vmatprep.subr.mxu0 0.0
    %1596 = vmatpush1.msra.mxu0 0.0
    %1597 = vmatprep.subr.mxu0 0.0
    %1598 = vmatpush1.msra.mxu0 0.0
    %1599 = vmatprep.subr.mxu0 0.0
    %1600 = vmatpush1.msra.mxu0 0.0
    %1601 = vmatprep.subr.mxu0 0.0
    %1602 = vmatpush1.msra.mxu0 0.0
    %1603 = vmatprep.subr.mxu0 0.0
    %1604 = vmatpush1.msra.mxu0 %v1566
    %1605 = vmatprep.subr.mxu0 0.0
    %1606 = vmatpush1.msra.mxu0 %v1565
    %1607 = vmatprep.subr.mxu0 0.0
    %1608 = vmatpush1.msra.mxu0 %v1564
    %1609 = vmatprep.subr.mxu0 0.0
    %1610 = vmatpush1.msra.mxu0 %v1563
    %1611 = vmatprep.subr.mxu0 0.0
    %1612 = vmatpush2.msra.mxu0 0.0
    %1613 = vmatprep.subr.mxu0 0.0
    %1614 = vmatpush2.msra.mxu0 0.0
    %1615 = vmatprep.subr.mxu0 0.0
    %1616 = vmatpush2.msra.mxu0 0.0
    %1617 = vmatprep.subr.mxu0 0.0
    %1618 = vmatpush2.msra.mxu0 0.0
    %1619 = vmatprep.subr.mxu0 0.0
    %1620 = vmatpush2.msra.mxu0 0.0
    %1621 = vmatprep.subr.mxu0 0.0
    %1622 = vmatpush2.msra.mxu0 0.0
    %1623 = vmatprep.subr.mxu0 0.0
    %1624 = vmatpush2.msra.mxu0 0.0
    %1625 = vmatprep.subr.mxu0 0.0
    %1626 = vmatpush2.msra.mxu0 0.0
    %1627 = vmatprep.subr.mxu0 0.0
    %1628 = vmatpush2.msra.mxu0 0.0
    %1629 = vmatprep.subr.mxu0 0.0
    %1630 = vmatpush2.msra.mxu0 0.0
    %1631 = vmatprep.subr.mxu0 0.0
    %1632 = vmatpush2.msra.mxu0 0.0
    %1633 = vmatprep.subr.mxu0 0.0
    %1634 = vmatpush2.msra.mxu0 0.0
    %1635 = vmatprep.subr.mxu0 0.0
    %1636 = vmatpush2.msra.mxu0 0.0
    %1637 = vmatprep.subr.mxu0 0.0
    %1638 = vmatpush2.msra.mxu0 0.0
    %1639 = vmatprep.subr.mxu0 0.0
    %1640 = vmatpush2.msra.mxu0 0.0
    %1641 = vmatprep.subr.mxu0 0.0
    %1642 = vmatpush2.msra.mxu0 0.0
    %1643 = vmatprep.mubr.f32.mxu0 0.0
    %1644 = vmatmul.mubr.f32.gmra.mxu0 %v362
    %v1645 = vpop.f32.mrf.mxu0
    %v1646 = vadd.f32 %v1572, %v1645
    %v1647 = vpop.f32.mrf.mxu0
    %1648 = vmatprep.mubr.f32.mxu0 0.0
    %1649 = vmatmul.mubr.f32.gmra.mxu0 %v534
    %v1650 = vpop.f32.mrf.mxu0
    %v1651 = vadd.f32 %v1572, %v1650
    %v1652 = vpop.f32.mrf.mxu0
    %1653 = vmatprep.mubr.f32.mxu0 0.0
    %1654 = vmatmul.mubr.f32.gmra.mxu0 %v706
    %v1655 = vpop.f32.mrf.mxu0
    %v1656 = vadd.f32 %v1572, %v1655
    %v1657 = vpop.f32.mrf.mxu0
    %1658 = vmatprep.mubr.f32.mxu0 0.0
    %1659 = vmatmul.mubr.f32.gmra.mxu0 %v878
    %v1660 = vpop.f32.mrf.mxu0
    %v1661 = vadd.f32 %v1572, %v1660
    %v1662 = vpop.f32.mrf.mxu0
    %1663 = vmatprep.mubr.f32.mxu0 0.0
    %1664 = vmatmul.mubr.f32.gmra.mxu0 %v1050
    %v1665 = vpop.f32.mrf.mxu0
    %v1666 = vadd.f32 %v1572, %v1665
    %v1667 = vpop.f32.mrf.mxu0
    %1668 = vmatprep.mubr.f32.mxu0 0.0
    %1669 = vmatmul.mubr.f32.gmra.mxu0 %v1222
    %v1670 = vpop.f32.mrf.mxu0
    %v1671 = vadd.f32 %v1572, %v1670
    %v1672 = vpop.f32.mrf.mxu0
    %1673 = vmatprep.mubr.f32.mxu0 0.0
    %1674 = vmatmul.mubr.f32.gmra.mxu0 %v1394
    %v1675 = vpop.f32.mrf.mxu0
    %v1676 = vadd.f32 %v1572, %v1675
    %v1677 = vpop.f32.mrf.mxu0
    %1678 = vmatprep.mubr.f32.mxu0 0.0
    %1679 = vmatmul.mubr.f32.gmra.mxu0 %v1577
    %v1680 = vpop.f32.mrf.mxu0
    %v1681 = vadd.f32 %v1572, %v1680
    %v1682 = vpop.f32.mrf.mxu0
    %1683 = vdwg.mxu0
    %1685 = vrot.lane.b32.xlu0 %v1651, 16
    %v1686 = vpop.permute.xlu0 %1685
    %1689 = vrot.lane.b32.xlu0 %v1656, 32
    %v1690 = vpop.permute.xlu0 %1689
    %1693 = vrot.lane.b32.xlu0 %v1661, 48
    %v1694 = vpop.permute.xlu0 %1693
    %1697 = vrot.lane.b32.xlu0 %v1666, 64
    %v1698 = vpop.permute.xlu0 %1697
    %1701 = vrot.lane.b32.xlu0 %v1671, 80
    %v1702 = vpop.permute.xlu0 %1701
    %1705 = vrot.lane.b32.xlu0 %v1676, 96
    %v1706 = vpop.permute.xlu0 %1705
    %1709 = vrot.lane.b32.xlu0 %v1681, 112
    %v1710 = vpop.permute.xlu0 %1709
    %1712 = vrot.lane.b32.xlu0 %v702, 32
    %v1713 = vpop.permute.xlu0 %1712
    %1715 = vrot.lane.b32.xlu0 %v874, 64
    %v1716 = vpop.permute.xlu0 %1715
    %1718 = vrot.lane.b32.xlu0 %v1390, 32
    %v1719 = vpop.permute.xlu0 %1718
    %1721 = vrot.lane.b32.xlu0 %v1562, 64
    %v1722 = vpop.permute.xlu0 %1721
    %v1724 = vsel %vm55, %v1646, %v1686
    %v1725 = vsel %vm186, %v1724, %v1690
    %vm1726 = vcmask 392192
    %v1727 = vsel %vm1726, %v1725, %v1694
    %vm1728 = vcmask 523264
    %v1729 = vsel %vm1728, %v1727, %v1698
    %vm1730 = vcmask 654336
    %v1731 = vsel %vm1730, %v1729, %v1702
    %vm1732 = vcmask 785408
    %v1733 = vsel %vm1732, %v1731, %v1706
    %vm1734 = vcmask 916480
    %v1735 = vsel %vm1734, %v1733, %v1710
    %v1736 = vsel %vm186, %v361, %v530
    %v1737 = vsel %vm1728, %v1736, %v1713
    %v1738 = vsel %vm1732, %v1737, %v1716
    %v1739 = vsel %vm186, %v1049, %v1218
    %v1740 = vsel %vm1728, %v1739, %v1719
    %v1741 = vsel %vm1732, %v1740, %v1722
    %1742 = vst [vmem:[#allocation2] sm:$0xff] %v1735
    %1743 = vst [vmem:[#allocation2 + $0x8] sm:$0xff] %v1738
    %1744 = vst [vmem:[#allocation2 + $0x10] sm:$0xff] %v1741
    // Predicated region
    $region34: #{tpu_custom_call.1} parent=1 // pred_check
      _
    $region35: #{tpu_custom_call.1} parent=1 // pred_check_branch
      %1746 = sbr.rel (0) target = $region37
    $region36: #{tpu_custom_call.1} parent=1 // pred_region
      %s1748 = ssub.s32 384, 384
      %1749 = vsyncadd [#allocation3], %s1748
      %s1751 = sshll.u32 [#allocation2], 4
      %s1752 = int_to_ptr.vmem [resolvable:$true] %s1751
      %1754 = dma.vmem_to_hbm [thread:$0]  %s1752, 384, %s8, [#allocation3]
    $region37: #{tpu_custom_call.1} parent=1 // pred_fallthru
      _
    // Predicated region
    $region38: #{tpu_custom_call.1} parent=1 // pred_check
      _
    $region39: #{tpu_custom_call.1} parent=1 // pred_check_branch
      %1756 = sbr.rel (0) target = $region41
    $region40: #{tpu_custom_call.1} parent=1 // pred_region
      %1757 = dma.done [#allocation3], 384
    $region41: #{tpu_custom_call.1} parent=1 // pred_fallthru
      _
    %1758 = vsyncpa [#allocation3], 1

</llo_original>
